<compile_context>
chip_gen: v6e
topology: v6e:2x2x1
jax: 0.10.0
libtpu: 0.0.40
codegen_flags: <defaults>
</compile_context>

<pallas_src>
import jax
import jax.numpy as jnp
from jax import lax
from jax.experimental import pallas as pl
from jax.experimental.pallas import tpu as pltpu

_LANE = 128
_SUBLANE = 8


def _round_up(n, m):
    return ((n + m - 1) // m) * m


def _vmem_budget():
    """Generation-aware VMEM budgets: (limit handed to Mosaic, budget used for tiling)."""
    cap = 64 * 1024 * 1024                      # conservative default (v7x per-core VMEM)
    try:
        cap = int(pltpu.get_tpu_info().vmem_capacity_bytes)
    except Exception:
        pass
    limit = max(min(int(cap * 0.70), 100 * 1024 * 1024), 32 * 1024 * 1024)
    budget = int(limit * 0.75)
    return limit, budget


def _pick_time_tile(T, Dp, Hp, kernel_sizes, x_bytes, budget):
    """Largest multiple-of-8 time tile (<=1024) whose rough VMEM estimate fits `budget`."""
    k0, k1, k2 = kernel_sizes
    p0, p1, p2 = (k0 - 1) // 2, (k1 - 1) // 2, (k2 - 1) // 2
    halo1 = p0 + p1
    lo = _round_up(max(halo1, p2, _SUBLANE), _SUBLANE)
    tile = max(min(_round_up(max(T, 1), _SUBLANE), 1024), lo)

    def est(tt):
        te, tg, th = tt + 2 * halo1, tt + 2 * p1, tt + 2 * p2
        # pass 1: double-buffered pipeline blocks + live temporaries + weights
        pipe1 = 2 * (te * Dp * x_bytes + tt * Hp * 2 + 2 * Hp * 4 + 2 * Dp * 4)
        tmp1 = 4 * (te * Dp + tg * 3 * Hp + tt * Hp) + 2 * tg * k0 * Dp
        w1 = 2 * (k0 * Dp * 2 * Hp * 2 + k1 * Hp * 4)
        # pass 2
        pipe2 = 2 * (2 * tt * Dp * x_bytes + th * Hp * 2 + 2 * Hp * 4)
        tmp2 = 4 * (th * Hp + tt * Dp) + 2 * tt * k2 * Hp
        w2 = 2 * (k2 * Hp * Dp * 2)
        return max(pipe1 + tmp1 + w1, pipe2 + tmp2 + w2)

    while tile > lo and est(tile) > budget:
        tile -= _SUBLANE
    return tile


def _make_halo_tiles(a, nT, Tt, halo):
    """(B, nT*Tt, C) -> (B, nT, Tt + 2*halo, C); out-of-range halo rows are zero."""
    B, _, C = a.shape
    ar = a.reshape(B, nT, Tt, C)
    if halo == 0:
        return ar
    z = jnp.zeros((B, 1, halo, C), a.dtype)
    before = jnp.concatenate([z, ar[:, :-1, Tt - halo:, :]], axis=1)
    after = jnp.concatenate([ar[:, 1:, :halo, :], z], axis=1)
    return jnp.concatenate([before, ar, after], axis=2)


def _row_mask(T, nT, Tt, halo):
    """(nT, Tt + 2*halo, 1) f32 validity columns: 1.0 where the global row is in [0, T)."""
    rows = (jnp.arange(nT, dtype=jnp.int32)[:, None] * Tt - halo
            + jnp.arange(Tt + 2 * halo, dtype=jnp.int32)[None, :])
    valid = jnp.logical_and(rows >= 0, rows < T)
    return valid.astype(jnp.float32)[:, :, None]


def _make_pass1_kernel(Tt, k0, k1, compute_dtype):
    """GroupNorm1 -> Conv1d(D->2H) -> GLU -> depthwise Conv1d(H) + GN2 partial stats."""
    p0, p1 = (k0 - 1) // 2, (k1 - 1) // 2
    halo = p0 + p1
    Tg = Tt + 2 * p1

    def kernel(x_ref, m_ref, st_ref, w0_ref, wd_ref, y2_ref, s2_ref):
        Hp = wd_ref.shape[-1]

        xe = (x_ref[0, 0] if halo > 0 else x_ref[0]).astype(jnp.float32)  # (Te, Dp)
        m_e = m_ref[0]                                                    # (Te, 1)
        st = st_ref[0]                                                    # (2, Dp)

        # GroupNorm1 folded into a per-(sample, channel) affine; rows outside [0, T)
        # act as the convolutions' zero padding -> cheap column-mask multiply.
        h = (xe * st[0:1, :] + st[1:2, :]) * m_e
        h = h.astype(compute_dtype)

        # Conv1d(D -> 2H): taps folded into the contraction dim (K = k0*Dp keeps the
        # 256-deep v6e/v7x MXUs full); both GLU halves fused in one weight.
        if k0 == 1:
            lhs = h[0:Tg, :]
        else:
            lhs = jnp.concatenate([h[j:j + Tg, :] for j in range(k0)], axis=1)
        ab = jnp.dot(lhs, w0_ref[...], preferred_element_type=jnp.float32)  # (Tg, 2Hp)
        glu = ab[:, :Hp] * jax.nn.sigmoid(ab[:, Hp:])                       # GLU, f32

        if p1 > 0:                          # zero padding rows seen by the depthwise conv
            glu = glu * m_e[p0:p0 + Tg, :]

        # Depthwise Conv1d (groups = H) on the VPU, f32.
        y2 = glu[0:Tt, :] * wd_ref[0]
        for j in range(1, k1):
            y2 = y2 + glu[j:j + Tt, :] * wd_ref[j]
        y2 = y2 * m_e[halo:halo + Tt, :]    # zero time-padding rows (keeps GN2 stats exact)

        y2_ref[0] = y2.astype(y2_ref.dtype)

        # Per-tile GroupNorm2 partial statistics (reduced in the wrapper) -> no serial
        # accumulator, so both grid axes stay "parallel" (v7x megacore friendly).
        s2_ref[0, 0] = jnp.concatenate(
            [jnp.sum(y2, axis=0, keepdims=True),
             jnp.sum(y2 * y2, axis=0, keepdims=True)], axis=0)

    return kernel


def _make_pass2_kernel(Tt, k2, compute_dtype):
    """GroupNorm2 -> SiLU -> Conv1d(H->D) -> residual add."""
    p2 = (k2 - 1) // 2

    def kernel(*refs):
        if p2 > 0:
            x_ref, y_ref, m_ref, st_ref, w2_ref, o_ref = refs
            y = y_ref[0, 0].astype(jnp.float32)          # (Th, Hp)
        else:
            x_ref, y_ref, st_ref, w2_ref, o_ref = refs
            y = y_ref[0].astype(jnp.float32)             # (Tt, Hp)

        st = st_ref[0]                                   # (2, Hp)
        h2 = y * st[0:1, :] + st[1:2, :]                 # GroupNorm2 (affine folded)
        h2 = h2 * jax.nn.sigmoid(h2)                     # SiLU
        if p2 > 0:                                       # conv2's zero padding
            h2 = h2 * m_ref[0]
        h2 = h2.astype(compute_dtype)

        if k2 == 1:
            lhs = h2
        else:
            lhs = jnp.concatenate([h2[j:j + Tt, :] for j in range(k2)], axis=1)
        y3 = jnp.dot(lhs, w2_ref[...], preferred_element_type=jnp.float32)  # (Tt, Dp)

        o_ref[0] = (x_ref[0].astype(jnp.float32) + y3).astype(o_ref.dtype)

    return kernel


def convolution_module_pallas(x, params, kernel_sizes, *, time_tile=None,
                              compute_dtype=jnp.bfloat16, eps=1e-5):
    """x: (B, T, D) channel-last; params in PyTorch layouts:
       (g1[D], b1[D], W0[2H,D,k0], Wd[H,1,k1], g2[H], b2[H], W2[D,H,k2])."""
    g1, b1, W0, Wd, g2, b2, W2 = params
    B, T, D = x.shape
    k0, k1, k2 = kernel_sizes
    for k in kernel_sizes:
        if k % 2 != 1:
            raise ValueError("ConvolutionModule assumes odd kernel sizes")
    H = W0.shape[0] // 2
    p0, p1, p2 = (k0 - 1) // 2, (k1 - 1) // 2, (k2 - 1) // 2
    halo1 = p0 + p1

    Dp = _round_up(D, _LANE)
    Hp = _round_up(H, _LANE)
    x_bytes = jnp.dtype(x.dtype).itemsize
    vmem_limit, vmem_budget = _vmem_budget()
    if time_tile is None:
        time_tile = _pick_time_tile(T, Dp, Hp, kernel_sizes, x_bytes, vmem_budget)
    Tt = _round_up(time_tile, _SUBLANE)
    assert Tt >= max(halo1, p2, 1), "time tile must cover the convolution halo"
    T_pad = _round_up(max(T, Tt), Tt)
    nT = T_pad // Tt
    Te = Tt + 2 * halo1
    Th = Tt + 2 * p2

    f32 = jnp.float32
    xf = x.astype(f32)

    # ---- GroupNorm1 per-sample statistics, folded into a per-channel affine ----
    # TODO(synk): single-pass variance (E[x^2]-mean^2, f32) can lose precision for inputs
    # with a huge mean-to-spread ratio; clamped with jnp.maximum below.
    mean1 = jnp.mean(xf, axis=(1, 2))
    var1 = jnp.mean(xf * xf, axis=(1, 2)) - mean1 * mean1
    rstd1 = lax.rsqrt(jnp.maximum(var1, 0.0) + eps)
    scale1 = rstd1[:, None] * g1.astype(f32)[None, :]                       # (B, D)
    shift1 = b1.astype(f32)[None, :] - mean1[:, None] * scale1
    st1 = jnp.pad(jnp.stack([scale1, shift1], axis=1), ((0, 0), (0, 0), (0, Dp - D)))

    # ---- layout plumbing: lane-dense channel padding, halo-extended time tiles ----
    x_pad = jnp.pad(x, ((0, 0), (0, T_pad - T), (0, Dp - D)))
    x_in = _make_halo_tiles(x_pad, nT, Tt, halo1) if halo1 > 0 else x_pad
    mask1 = _row_mask(T, nT, Tt, halo1)                                     # (nT, Te, 1)

    # fused + tap-folded weights (bf16 MXU operands; zero rows/cols for padded channels)
    pad3 = lambda w: jnp.pad(w, ((0, 0), (0, Dp - D), (0, Hp - H)))
    w0a = jnp.transpose(W0[:H], (2, 1, 0))                      # (k0, D, H) GLU content
    w0b = jnp.transpose(W0[H:], (2, 1, 0))                      # (k0, D, H) GLU gate
    w0 = jnp.concatenate([pad3(w0a), pad3(w0b)], axis=2)        # (k0, Dp, 2Hp)
    w0 = w0.reshape(k0 * Dp, 2 * Hp).astype(compute_dtype)
    wd = jnp.pad(jnp.transpose(Wd[:, 0, :], (1, 0))[:, None, :].astype(f32),
                 ((0, 0), (0, 0), (0, Hp - H)))                  # (k1, 1, Hp)
    w2 = jnp.pad(jnp.transpose(W2, (2, 1, 0)),
                 ((0, 0), (0, Hp - H), (0, Dp - D)))             # (k2, Hp, Dp)
    w2 = w2.reshape(k2 * Hp, Dp).astype(compute_dtype)

    cparams = pltpu.CompilerParams(
        dimension_semantics=("parallel", "parallel"),
        vmem_limit_bytes=vmem_limit)

    # ------------------------------ pass 1 ------------------------------
    if halo1 > 0:
        x_spec1 = pl.BlockSpec((1, 1, Te, Dp), lambda b, t: (b, t, 0, 0))
    else:
        x_spec1 = pl.BlockSpec((1, Tt, Dp), lambda b, t: (b, t, 0))

    y2, s2 = pl.pallas_call(
        _make_pass1_kernel(Tt, k0, k1, compute_dtype),
        grid=(B, nT),
        in_specs=[x_spec1,
                  pl.BlockSpec((1, Te, 1), lambda b, t: (t, 0, 0)),
                  pl.BlockSpec((1, 2, Dp), lambda b, t: (b, 0, 0)),
                  pl.BlockSpec((k0 * Dp, 2 * Hp), lambda b, t: (0, 0)),
                  pl.BlockSpec((k1, 1, Hp), lambda b, t: (0, 0, 0))],
        out_specs=[pl.BlockSpec((1, Tt, Hp), lambda b, t: (b, t, 0)),
                   pl.BlockSpec((1, 1, 2, Hp), lambda b, t: (b, t, 0, 0))],
        out_shape=[jax.ShapeDtypeStruct((B, T_pad, Hp), compute_dtype),
                   jax.ShapeDtypeStruct((B, nT, 2, Hp), f32)],
        compiler_params=cparams,
    )(x_in, mask1, st1, w0, wd)

    # ---- finish GroupNorm2 statistics (tiny per-sample math), fold into affine ----
    cnt = float(T * H)
    s_sum = jnp.sum(s2[:, :, 0, :], axis=(1, 2))
    s_sq = jnp.sum(s2[:, :, 1, :], axis=(1, 2))
    mean2 = s_sum / cnt
    var2 = s_sq / cnt - mean2 * mean2
    rstd2 = lax.rsqrt(jnp.maximum(var2, 0.0) + eps)
    scale2 = rstd2[:, None] * g2.astype(f32)[None, :]
    shift2 = b2.astype(f32)[None, :] - mean2[:, None] * scale2
    st2 = jnp.pad(jnp.stack([scale2, shift2], axis=1), ((0, 0), (0, 0), (0, Hp - H)))

    # ------------------------------ pass 2 ------------------------------
    in_specs2 = [pl.BlockSpec((1, Tt, Dp), lambda b, t: (b, t, 0))]
    args2 = [x_pad]
    if p2 > 0:
        y_in = _make_halo_tiles(y2, nT, Tt, p2)
        in_specs2 += [pl.BlockSpec((1, 1, Th, Hp), lambda b, t: (b, t, 0, 0)),
                      pl.BlockSpec((1, Th, 1), lambda b, t: (t, 0, 0))]
        args2 += [y_in, _row_mask(T, nT, Tt, p2)]
    else:
        in_specs2 += [pl.BlockSpec((1, Tt, Hp), lambda b, t: (b, t, 0))]
        args2 += [y2]
    in_specs2 += [pl.BlockSpec((1, 2, Hp), lambda b, t: (b, 0, 0)),
                  pl.BlockSpec((k2 * Hp, Dp), lambda b, t: (0, 0))]
    args2 += [st2, w2]

    out_pad = pl.pallas_call(
        _make_pass2_kernel(Tt, k2, compute_dtype),
        grid=(B, nT),
        in_specs=in_specs2,
        out_specs=pl.BlockSpec((1, Tt, Dp), lambda b, t: (b, t, 0)),
        out_shape=jax.ShapeDtypeStruct((B, T_pad, Dp), x.dtype),
        compiler_params=cparams,
    )(*args2)

    return out_pad[:, :T, :D]


def ref_forward(x, params, kernel_sizes, conv_dtype=jnp.float32, inter_dtype=None):
    """Pure-JAX reference mirroring the PyTorch module (NCW layout, lax.conv).
    `conv_dtype` controls the pointwise-conv operand precision (bf16 to match the kernel);
    `inter_dtype` mirrors the kernel's inter-pass y2 buffer rounding (stats stay f32)."""
    g1, b1, W0, Wd, g2, b2, W2 = params
    eps = 1e-5
    k0, k1, k2 = kernel_sizes
    H = W0.shape[0] // 2
    dn = ('NCH', 'OIH', 'NCH')

    def conv(h, W, k, groups=1, dtype=conv_dtype):
        p = (k - 1) // 2
        return lax.conv_general_dilated(
            h.astype(dtype), W.astype(dtype), (1,), [(p, p)],
            dimension_numbers=dn, feature_group_count=groups,
            preferred_element_type=jnp.float32)

    xt = jnp.transpose(x, (0, 2, 1)).astype(jnp.float32)        # (B, D, T)

    mean = jnp.mean(xt, axis=(1, 2), keepdims=True)
    var = jnp.mean((xt - mean) ** 2, axis=(1, 2), keepdims=True)
    h = (xt - mean) * lax.rsqrt(var + eps) * g1[None, :, None] + b1[None, :, None]

    h = conv(h, W0, k0)
    h = h[:, :H] * jax.nn.sigmoid(h[:, H:])                     # GLU

    h = conv(h, Wd, k1, groups=H, dtype=jnp.float32)            # depthwise (f32, like kernel)

    mean = jnp.mean(h, axis=(1, 2), keepdims=True)
    var = jnp.mean((h - mean) ** 2, axis=(1, 2), keepdims=True)
    if inter_dtype is not None:
        h = h.astype(inter_dtype).astype(jnp.float32)           # mirror bf16 y2 buffer
    h = (h - mean) * lax.rsqrt(var + eps) * g2[None, :, None] + b2[None, :, None]
    h = h * jax.nn.sigmoid(h)                                   # SiLU

    h = conv(h, W2, k2)

    return jnp.transpose(xt + h, (0, 2, 1)).astype(x.dtype)


if __name__ == "__main__":
    B, T, D, H = 2, 64, 64, 128
    kernel_sizes = (3, 3, 1)
    k0, k1, k2 = kernel_sizes

    key = jax.random.PRNGKey(0)
    ks = jax.random.split(key, 8)
    x = jax.random.normal(ks[0], (B, T, D), jnp.float32)

    # Deterministic synthetic parameters in PyTorch layouts.
    g1 = 1.0 + 0.1 * jax.random.normal(ks[1], (D,), jnp.float32)
    b1 = 0.1 * jax.random.normal(ks[2], (D,), jnp.float32)
    W0 = 0.3 * jax.random.normal(ks[3], (2 * H, D, k0), jnp.float32)
    Wd = 0.3 * jax.random.normal(ks[4], (H, 1, k1), jnp.float32)
    g2 = 1.0 + 0.1 * jax.random.normal(ks[5], (H,), jnp.float32)
    b2 = 0.1 * jax.random.normal(ks[6], (H,), jnp.float32)
    W2 = 0.3 * jax.random.normal(ks[7], (D, H, k2), jnp.float32)
    params = (g1, b1, W0, Wd, g2, b2, W2)

    run = jax.jit(lambda xx, *p: convolution_module_pallas(
        xx, p, kernel_sizes, time_tile=32))            # small tile -> exercises multi-tile halo
    out = jax.block_until_ready(run(x, *params))
    assert out.shape == x.shape

    # Reference with matching matmul-operand precision (bf16 operands / f32 accumulate)
    # and the same bf16 inter-pass buffer; tolerance covers accumulation-order effects.
    ref = ref_forward(x, params, kernel_sizes,
                      conv_dtype=jnp.bfloat16, inter_dtype=jnp.bfloat16)
    max_err = float(jnp.max(jnp.abs(out - ref)))
    assert jnp.allclose(out, ref, atol=2e-2, rtol=2e-2), f"max abs err = {max_err}"

    print("KERNEL_OK")
</pallas_src>

<mosaic_0001>
module attributes {stable_mosaic.version = 11 : i64} {
  func.func @kernel(%arg0: i32, %arg1: i32, %arg2: memref<1x1x36x128xf32, #tpu.memory_space<vmem>>, %arg3: memref<1x36x1xf32, #tpu.memory_space<vmem>>, %arg4: memref<1x2x128xf32, #tpu.memory_space<vmem>>, %arg5: memref<384x256xbf16, #tpu.memory_space<vmem>>, %arg6: memref<3x1x128xf32, #tpu.memory_space<vmem>>, %arg7: memref<1x32x128xbf16, #tpu.memory_space<vmem>>, %arg8: memref<1x1x2x128xf32, #tpu.memory_space<vmem>>) attributes {dimension_semantics = [#tpu.dimension_semantics<parallel>, #tpu.dimension_semantics<parallel>], iteration_bounds = array<i64: 2, 2>, scalar_prefetch = 0 : i64, scratch_operands = 0 : i64, tpu.core_type = #tpu.core_type<tc>, window_params = [{transform_indices = @transform_0, window_bounds = array<i64: 1, 1, 36, 128>}, {transform_indices = @transform_1, window_bounds = array<i64: 1, 36, 1>}, {transform_indices = @transform_2, window_bounds = array<i64: 1, 2, 128>}, {pipeline_mode = #tpu.pipeline_mode<synchronous>, transform_indices = @transform_3, window_bounds = array<i64: 384, 256>}, {pipeline_mode = #tpu.pipeline_mode<synchronous>, transform_indices = @transform_4, window_bounds = array<i64: 3, 1, 128>}, {transform_indices = @transform_5, window_bounds = array<i64: 1, 32, 128>}, {transform_indices = @transform_6, window_bounds = array<i64: 1, 1, 2, 128>}]} {
    %c0 = arith.constant 0 : index
    %c0_0 = arith.constant 0 : index
    %c0_1 = arith.constant 0 : index
    %c0_2 = arith.constant 0 : index
    %0 = vector.load %arg2[%c0, %c0_0, %c0_1, %c0_2] : memref<1x1x36x128xf32, #tpu.memory_space<vmem>>, vector<1x1x36x128xf32>
    %1 = vector.shape_cast %0 : vector<1x1x36x128xf32> to vector<36x128xf32>
    %c0_3 = arith.constant 0 : index
    %c0_4 = arith.constant 0 : index
    %c0_5 = arith.constant 0 : index
    %2 = vector.load %arg3[%c0_3, %c0_4, %c0_5] : memref<1x36x1xf32, #tpu.memory_space<vmem>>, vector<1x36x1xf32>
    %3 = vector.shape_cast %2 : vector<1x36x1xf32> to vector<36x1xf32>
    %c0_6 = arith.constant 0 : index
    %c0_7 = arith.constant 0 : index
    %c0_8 = arith.constant 0 : index
    %4 = vector.load %arg4[%c0_6, %c0_7, %c0_8] : memref<1x2x128xf32, #tpu.memory_space<vmem>>, vector<1x2x128xf32>
    %5 = vector.shape_cast %4 : vector<1x2x128xf32> to vector<2x128xf32>
    %6 = vector.extract_strided_slice %5 {offsets = [0, 0], sizes = [1, 128], strides = [1, 1]} : vector<2x128xf32> to vector<1x128xf32>
    %7 = vector.broadcast %6 : vector<1x128xf32> to vector<36x128xf32>
    %8 = arith.mulf %1, %7 : vector<36x128xf32>
    %9 = vector.extract_strided_slice %5 {offsets = [1, 0], sizes = [1, 128], strides = [1, 1]} : vector<2x128xf32> to vector<1x128xf32>
    %10 = vector.broadcast %9 : vector<1x128xf32> to vector<36x128xf32>
    %11 = arith.addf %8, %10 : vector<36x128xf32>
    %12 = vector.broadcast %3 : vector<36x1xf32> to vector<36x128xf32>
    %13 = arith.mulf %11, %12 : vector<36x128xf32>
    %14 = arith.truncf %13 : vector<36x128xf32> to vector<36x128xbf16>
    %15 = vector.extract_strided_slice %14 {offsets = [0, 0], sizes = [34, 128], strides = [1, 1]} : vector<36x128xbf16> to vector<34x128xbf16>
    %16 = vector.extract_strided_slice %14 {offsets = [1, 0], sizes = [34, 128], strides = [1, 1]} : vector<36x128xbf16> to vector<34x128xbf16>
    %17 = vector.extract_strided_slice %14 {offsets = [2, 0], sizes = [34, 128], strides = [1, 1]} : vector<36x128xbf16> to vector<34x128xbf16>
    %18 = tpu.concatenate %15, %16, %17 in 1 : vector<34x128xbf16>, vector<34x128xbf16>, vector<34x128xbf16> -> vector<34x384xbf16>
    %c0_9 = arith.constant 0 : index
    %c0_10 = arith.constant 0 : index
    %19 = vector.load %arg5[%c0_9, %c0_10] : memref<384x256xbf16, #tpu.memory_space<vmem>>, vector<384x256xbf16>
    %cst = arith.constant dense<0.000000e+00> : vector<34x256xf32>
    %20 = tpu.matmul %18, %19, %cst {dimension_numbers = #tpu.dot_dimension_numbers<[1], [0], [0], [1], [0, 0, 1, 1], [], []>} : vector<34x384xbf16>, vector<384x256xbf16>, vector<34x256xf32> -> vector<34x256xf32>
    %21 = vector.extract_strided_slice %20 {offsets = [0, 0], sizes = [34, 128], strides = [1, 1]} : vector<34x256xf32> to vector<34x128xf32>
    %22 = vector.extract_strided_slice %20 {offsets = [0, 128], sizes = [34, 128], strides = [1, 1]} : vector<34x256xf32> to vector<34x128xf32>
    %23 = arith.negf %22 : vector<34x128xf32>
    %24 = math.exp %23 : vector<34x128xf32>
    %cst_11 = arith.constant 1.000000e+00 : f32
    %25 = vector.broadcast %cst_11 : f32 to vector<34x128xf32>
    %26 = arith.addf %25, %24 : vector<34x128xf32>
    %27 = arith.divf %25, %26 : vector<34x128xf32>
    %28 = arith.mulf %21, %27 : vector<34x128xf32>
    %29 = vector.extract_strided_slice %3 {offsets = [1, 0], sizes = [34, 1], strides = [1, 1]} : vector<36x1xf32> to vector<34x1xf32>
    %30 = vector.broadcast %29 : vector<34x1xf32> to vector<34x128xf32>
    %31 = arith.mulf %28, %30 : vector<34x128xf32>
    %32 = vector.extract_strided_slice %31 {offsets = [0, 0], sizes = [32, 128], strides = [1, 1]} : vector<34x128xf32> to vector<32x128xf32>
    %c0_12 = arith.constant 0 : index
    %c0_13 = arith.constant 0 : index
    %c0_14 = arith.constant 0 : index
    %33 = vector.load %arg6[%c0_12, %c0_13, %c0_14] : memref<3x1x128xf32, #tpu.memory_space<vmem>>, vector<1x1x128xf32>
    %34 = vector.shape_cast %33 : vector<1x1x128xf32> to vector<1x128xf32>
    %35 = vector.broadcast %34 : vector<1x128xf32> to vector<32x128xf32>
    %36 = arith.mulf %32, %35 : vector<32x128xf32>
    %37 = vector.extract_strided_slice %31 {offsets = [1, 0], sizes = [32, 128], strides = [1, 1]} : vector<34x128xf32> to vector<32x128xf32>
    %c1 = arith.constant 1 : index
    %c0_15 = arith.constant 0 : index
    %c0_16 = arith.constant 0 : index
    %38 = vector.load %arg6[%c1, %c0_15, %c0_16] : memref<3x1x128xf32, #tpu.memory_space<vmem>>, vector<1x1x128xf32>
    %39 = vector.shape_cast %38 : vector<1x1x128xf32> to vector<1x128xf32>
    %40 = vector.broadcast %39 : vector<1x128xf32> to vector<32x128xf32>
    %41 = arith.mulf %37, %40 : vector<32x128xf32>
    %42 = arith.addf %36, %41 : vector<32x128xf32>
    %43 = vector.extract_strided_slice %31 {offsets = [2, 0], sizes = [32, 128], strides = [1, 1]} : vector<34x128xf32> to vector<32x128xf32>
    %c2 = arith.constant 2 : index
    %c0_17 = arith.constant 0 : index
    %c0_18 = arith.constant 0 : index
    %44 = vector.load %arg6[%c2, %c0_17, %c0_18] : memref<3x1x128xf32, #tpu.memory_space<vmem>>, vector<1x1x128xf32>
    %45 = vector.shape_cast %44 : vector<1x1x128xf32> to vector<1x128xf32>
    %46 = vector.broadcast %45 : vector<1x128xf32> to vector<32x128xf32>
    %47 = arith.mulf %43, %46 : vector<32x128xf32>
    %48 = arith.addf %42, %47 : vector<32x128xf32>
    %49 = vector.extract_strided_slice %3 {offsets = [2, 0], sizes = [32, 1], strides = [1, 1]} : vector<36x1xf32> to vector<32x1xf32>
    %50 = vector.broadcast %49 : vector<32x1xf32> to vector<32x128xf32>
    %51 = arith.mulf %48, %50 : vector<32x128xf32>
    %52 = arith.truncf %51 : vector<32x128xf32> to vector<32x128xbf16>
    %c0_19 = arith.constant 0 : index
    %c0_20 = arith.constant 0 : index
    %c0_21 = arith.constant 0 : index
    %53 = vector.load %arg7[%c0_19, %c0_20, %c0_21] : memref<1x32x128xbf16, #tpu.memory_space<vmem>>, vector<1x32x128xbf16>
    %54 = vector.shape_cast %53 : vector<1x32x128xbf16> to vector<32x128xbf16>
    %55 = vector.shape_cast %52 : vector<32x128xbf16> to vector<1x32x128xbf16>
    tpu.vector_store %arg7[%c0_19, %c0_20, %c0_21], %55 {strides = array<i32>} : memref<1x32x128xbf16, #tpu.memory_space<vmem>>, vector<1x32x128xbf16>,
    %cst_22 = arith.constant dense<0.000000e+00> : vector<128xf32>
    %56 = vector.multi_reduction <add>, %51, %cst_22 [0] : vector<32x128xf32> to vector<128xf32>
    %57 = vector.shape_cast %56 : vector<128xf32> to vector<1x128xf32>
    %58 = arith.mulf %51, %51 : vector<32x128xf32>
    %cst_23 = arith.constant dense<0.000000e+00> : vector<128xf32>
    %59 = vector.multi_reduction <add>, %58, %cst_23 [0] : vector<32x128xf32> to vector<128xf32>
    %60 = vector.shape_cast %59 : vector<128xf32> to vector<1x128xf32>
    %61 = tpu.concatenate %57, %60 in 0 : vector<1x128xf32>, vector<1x128xf32> -> vector<2x128xf32>
    %c0_24 = arith.constant 0 : index
    %c0_25 = arith.constant 0 : index
    %c0_26 = arith.constant 0 : index
    %c0_27 = arith.constant 0 : index
    %62 = vector.load %arg8[%c0_24, %c0_25, %c0_26, %c0_27] : memref<1x1x2x128xf32, #tpu.memory_space<vmem>>, vector<1x1x2x128xf32>
    %63 = vector.shape_cast %62 : vector<1x1x2x128xf32> to vector<2x128xf32>
    %64 = vector.shape_cast %61 : vector<2x128xf32> to vector<1x1x2x128xf32>
    tpu.vector_store %arg8[%c0_24, %c0_25, %c0_26, %c0_27], %64 {strides = array<i32>} : memref<1x1x2x128xf32, #tpu.memory_space<vmem>>, vector<1x1x2x128xf32>,
    return
  }
  func.func @transform_0(%arg0: i32, %arg1: i32) -> (i32, i32, i32, i32) {
    %c0_i32 = arith.constant 0 : i32
    %c0_i32_0 = arith.constant 0 : i32
    %c0_i32_1 = arith.constant 0 : i32
    return %arg0, %arg1, %c0_i32, %c0_i32_0 : i32, i32, i32, i32
  }
  func.func @transform_1(%arg0: i32, %arg1: i32) -> (i32, i32, i32) {
    %c0_i32 = arith.constant 0 : i32
    %c0_i32_0 = arith.constant 0 : i32
    %c0_i32_1 = arith.constant 0 : i32
    return %arg1, %c0_i32, %c0_i32_0 : i32, i32, i32
  }
  func.func @transform_2(%arg0: i32, %arg1: i32) -> (i32, i32, i32) {
    %c0_i32 = arith.constant 0 : i32
    %c0_i32_0 = arith.constant 0 : i32
    %c0_i32_1 = arith.constant 0 : i32
    return %arg0, %c0_i32, %c0_i32_0 : i32, i32, i32
  }
  func.func @transform_3(%arg0: i32, %arg1: i32) -> (i32, i32) {
    %c0_i32 = arith.constant 0 : i32
    %c0_i32_0 = arith.constant 0 : i32
    %c0_i32_1 = arith.constant 0 : i32
    return %c0_i32, %c0_i32_0 : i32, i32
  }
  func.func @transform_4(%arg0: i32, %arg1: i32) -> (i32, i32, i32) {
    %c0_i32 = arith.constant 0 : i32
    %c0_i32_0 = arith.constant 0 : i32
    %c0_i32_1 = arith.constant 0 : i32
    %c0_i32_2 = arith.constant 0 : i32
    return %c0_i32, %c0_i32_0, %c0_i32_1 : i32, i32, i32
  }
  func.func @transform_5(%arg0: i32, %arg1: i32) -> (i32, i32, i32) {
    %c0_i32 = arith.constant 0 : i32
    %c0_i32_0 = arith.constant 0 : i32
    return %arg0, %arg1, %c0_i32 : i32, i32, i32
  }
  func.func @transform_6(%arg0: i32, %arg1: i32) -> (i32, i32, i32, i32) {
    %c0_i32 = arith.constant 0 : i32
    %c0_i32_0 = arith.constant 0 : i32
    %c0_i32_1 = arith.constant 0 : i32
    return %arg0, %arg1, %c0_i32, %c0_i32_0 : i32, i32, i32, i32
  }
}

module attributes {stable_mosaic.version = 11 : i64} {
  func.func @kernel(%arg0: i32, %arg1: i32, %arg2: memref<1x32x128xf32, #tpu.memory_space<vmem>>, %arg3: memref<1x32x128xbf16, #tpu.memory_space<vmem>>, %arg4: memref<1x2x128xf32, #tpu.memory_space<vmem>>, %arg5: memref<128x128xbf16, #tpu.memory_space<vmem>>, %arg6: memref<1x32x128xf32, #tpu.memory_space<vmem>>) attributes {dimension_semantics = [#tpu.dimension_semantics<parallel>, #tpu.dimension_semantics<parallel>], iteration_bounds = array<i64: 2, 2>, scalar_prefetch = 0 : i64, scratch_operands = 0 : i64, tpu.core_type = #tpu.core_type<tc>, window_params = [{transform_indices = @transform_0, window_bounds = array<i64: 1, 32, 128>}, {transform_indices = @transform_1, window_bounds = array<i64: 1, 32, 128>}, {transform_indices = @transform_2, window_bounds = array<i64: 1, 2, 128>}, {pipeline_mode = #tpu.pipeline_mode<synchronous>, transform_indices = @transform_3, window_bounds = array<i64: 128, 128>}, {transform_indices = @transform_4, window_bounds = array<i64: 1, 32, 128>}]} {
    %c0 = arith.constant 0 : index
    %c0_0 = arith.constant 0 : index
    %c0_1 = arith.constant 0 : index
    %0 = vector.load %arg3[%c0, %c0_0, %c0_1] : memref<1x32x128xbf16, #tpu.memory_space<vmem>>, vector<1x32x128xbf16>
    %1 = vector.shape_cast %0 : vector<1x32x128xbf16> to vector<32x128xbf16>
    %2 = arith.extf %1 : vector<32x128xbf16> to vector<32x128xf32>
    %c0_2 = arith.constant 0 : index
    %c0_3 = arith.constant 0 : index
    %c0_4 = arith.constant 0 : index
    %3 = vector.load %arg4[%c0_2, %c0_3, %c0_4] : memref<1x2x128xf32, #tpu.memory_space<vmem>>, vector<1x2x128xf32>
    %4 = vector.shape_cast %3 : vector<1x2x128xf32> to vector<2x128xf32>
    %5 = vector.extract_strided_slice %4 {offsets = [0, 0], sizes = [1, 128], strides = [1, 1]} : vector<2x128xf32> to vector<1x128xf32>
    %6 = vector.broadcast %5 : vector<1x128xf32> to vector<32x128xf32>
    %7 = arith.mulf %2, %6 : vector<32x128xf32>
    %8 = vector.extract_strided_slice %4 {offsets = [1, 0], sizes = [1, 128], strides = [1, 1]} : vector<2x128xf32> to vector<1x128xf32>
    %9 = vector.broadcast %8 : vector<1x128xf32> to vector<32x128xf32>
    %10 = arith.addf %7, %9 : vector<32x128xf32>
    %11 = arith.negf %10 : vector<32x128xf32>
    %12 = math.exp %11 : vector<32x128xf32>
    %cst = arith.constant 1.000000e+00 : f32
    %13 = vector.broadcast %cst : f32 to vector<32x128xf32>
    %14 = arith.addf %13, %12 : vector<32x128xf32>
    %15 = arith.divf %13, %14 : vector<32x128xf32>
    %16 = arith.mulf %10, %15 : vector<32x128xf32>
    %17 = arith.truncf %16 : vector<32x128xf32> to vector<32x128xbf16>
    %c0_5 = arith.constant 0 : index
    %c0_6 = arith.constant 0 : index
    %18 = vector.load %arg5[%c0_5, %c0_6] : memref<128x128xbf16, #tpu.memory_space<vmem>>, vector<128x128xbf16>
    %cst_7 = arith.constant dense<0.000000e+00> : vector<32x128xf32>
    %19 = tpu.matmul %17, %18, %cst_7 {dimension_numbers = #tpu.dot_dimension_numbers<[1], [0], [0], [1], [0, 0, 1, 1], [], []>} : vector<32x128xbf16>, vector<128x128xbf16>, vector<32x128xf32> -> vector<32x128xf32>
    %c0_8 = arith.constant 0 : index
    %c0_9 = arith.constant 0 : index
    %c0_10 = arith.constant 0 : index
    %20 = vector.load %arg2[%c0_8, %c0_9, %c0_10] : memref<1x32x128xf32, #tpu.memory_space<vmem>>, vector<1x32x128xf32>
    %21 = vector.shape_cast %20 : vector<1x32x128xf32> to vector<32x128xf32>
    %22 = arith.addf %21, %19 : vector<32x128xf32>
    %c0_11 = arith.constant 0 : index
    %c0_12 = arith.constant 0 : index
    %c0_13 = arith.constant 0 : index
    %23 = vector.load %arg6[%c0_11, %c0_12, %c0_13] : memref<1x32x128xf32, #tpu.memory_space<vmem>>, vector<1x32x128xf32>
    %24 = vector.shape_cast %23 : vector<1x32x128xf32> to vector<32x128xf32>
    %25 = vector.shape_cast %22 : vector<32x128xf32> to vector<1x32x128xf32>
    tpu.vector_store %arg6[%c0_11, %c0_12, %c0_13], %25 {strides = array<i32>} : memref<1x32x128xf32, #tpu.memory_space<vmem>>, vector<1x32x128xf32>,
    return
  }
  func.func @transform_0(%arg0: i32, %arg1: i32) -> (i32, i32, i32) {
    %c0_i32 = arith.constant 0 : i32
    %c0_i32_0 = arith.constant 0 : i32
    return %arg0, %arg1, %c0_i32 : i32, i32, i32
  }
  func.func @transform_1(%arg0: i32, %arg1: i32) -> (i32, i32, i32) {
    %c0_i32 = arith.constant 0 : i32
    %c0_i32_0 = arith.constant 0 : i32
    return %arg0, %arg1, %c0_i32 : i32, i32, i32
  }
  func.func @transform_2(%arg0: i32, %arg1: i32) -> (i32, i32, i32) {
    %c0_i32 = arith.constant 0 : i32
    %c0_i32_0 = arith.constant 0 : i32
    %c0_i32_1 = arith.constant 0 : i32
    return %arg0, %c0_i32, %c0_i32_0 : i32, i32, i32
  }
  func.func @transform_3(%arg0: i32, %arg1: i32) -> (i32, i32) {
    %c0_i32 = arith.constant 0 : i32
    %c0_i32_0 = arith.constant 0 : i32
    %c0_i32_1 = arith.constant 0 : i32
    return %c0_i32, %c0_i32_0 : i32, i32
  }
  func.func @transform_4(%arg0: i32, %arg1: i32) -> (i32, i32, i32) {
    %c0_i32 = arith.constant 0 : i32
    %c0_i32_0 = arith.constant 0 : i32
    return %arg0, %arg1, %c0_i32 : i32, i32, i32
  }
}

</mosaic_0001>

<llo_original>
// kernel: _lambda_.3
$region0: #{_lambda_.3}
  #allocation0 [shape = 'u32[]', space=smem, size = 0x4, offset = 0x4, fixed_abs, tag = 'smem constant byte address 0x4 - core index']
  #allocation1 [shape = 'u32[144,128]{1,0:T(1,128)}', space=vmem, size = 0x12000, scoped, tag = 'internal scratch']
  %s0 = inlined_call_operand.vmem [shape: f32[2,64,128], index: 0, kind: input, shape index: {}]
  %s1 = inlined_call_operand.vmem [shape: bf16[2,64,128], index: 1, kind: input, shape index: {}]
  %s2 = inlined_call_operand.vmem [shape: f32[2,2,128], index: 2, kind: input, shape index: {}]
  %s3 = inlined_call_operand.vmem [shape: bf16[128,128], index: 3, kind: input, shape index: {}]
  %s4 = inlined_call_operand.hbm [shape: f32[2,64,128], index: 4, kind: output, shape index: {}]
  %s5 = sld [smem:[#allocation0]]
  $region49: #{_lambda_.3} parent=0
    _
  %s7 = ssub.s32 1, %s5
  %s8 = scalar_select 0, %s7, %s5
  $region1: #{_lambda_.3} parent=0
    #allocation2 [shape = 'u8[32768]{0}', space=vmem, size = 0x8000, scoped, tag = 'output window, operand 0']
    #allocation3 [shape = 's32[2]{0}', space=sflag, size = 0x8, scoped, tag = 'scoped memory for _lambda_.3']
    %9 = vsyncpa [#allocation3], 0
    %s10 = scalar_lea.sflag [#allocation3], 1
    %11 = vsyncpa %s10, 0
    loop: start=0, step=1, limit=6
    $region2: #{_lambda_.3} parent=1 // loop_pre_header
      _
    $region3: #{_lambda_.3} parent=1 // loop_header
      %s13 = sphi 0, %s17
      %p14 = scmp.ge.s32.totalorder %s13, 6
      %s20 = sphi 0, %s32
      %s21 = sphi 0, %s28
      %s22 = sphi 0, %s20
      %s23 = sphi 0, %s21
      %s24 = sphi 0, %s22
      %s25 = sphi 0, %s23
      %s37 = sphi 0, %s39
      %s40 = sphi 0, %s37
      %s41 = sphi 0, %s40
      %s57 = sphi 0, %s41
      %s65 = sphi 0, %s67
      %s68 = sphi 0, %s65
      %s69 = sphi 0, %s68
      %s85 = sphi 0, %s69
      %s91 = sphi 0, %s93
      %s94 = sphi 0, %s91
      %s95 = sphi 0, %s94
      %s111 = sphi 0, %s95
      %s115 = sphi 0, %s115
      %s117 = sphi 0, %s115
      %s118 = sphi 0, %s117
      %s132 = sphi 0, %s118
      %s140 = sphi 0, %s142
      %s143 = sphi 0, %s140
      %s144 = sphi 0, %s143
      %s160 = sphi 0, %s144
    $region4: #{_lambda_.3} parent=1 // loop_header_branch
      %16 = sbr.rel (%p14) target = $region8
    $region5: #{_lambda_.3} parent=1 // loop_body
      %s18 = ssub.s32 %s13, 1
      %s19 = ssub.s32 %s13, 2
      %s26 = sadd.s32 1, %s21
      %p27 = scmp.ge.s32.totalorder %s26, 2
      %s28 = scalar_select %p27, 0, %s26
      %s29 = sadd.s32 1, %s20
      %s30 = scalar_select %p27, %s29, %s20
      %p31 = scmp.ge.s32.totalorder %s30, 2
      %s32 = scalar_select %p31, 0, %s30
      %s33 = ssub.s32 %s20, %s32
      %s34 = ssub.s32 %s21, %s28
      %s35 = sor.u32 %s33, %s34
      %p36 = scmp.eq.s32.totalorder %s35, 0
      %s38 = sadd.s32 %s37, 1
      %s39 = scalar_select %p36, %s37, %s38
      %p42 = pneg %p36
      %p43 = scmp.eq.s32.totalorder %s13, 3
      %p44 = por %p42, %p43
      %p45 = scmp.ne.s32.totalorder %s37, %s40
      %p46 = scmp.eq.s32.totalorder %s13, 0
      %p47 = por %p45, %p46
      %p48 = scmp.ne.s32.totalorder %s37, %s40
      %p49 = scmp.eq.s32.totalorder %s18, 3
      %p50 = por %p48, %p49
      %p51 = scmp.ne.s32.totalorder %s40, %s41
      %p52 = scmp.eq.s32.totalorder %s18, 0
      %p53 = por %p51, %p52
      %p54 = scmp.ne.s32.totalorder %s40, %s41
      %p55 = scmp.eq.s32.totalorder %s19, 3
      %p56 = por %p54, %p55
      %p58 = scmp.ne.s32.totalorder %s41, %s57
      %p59 = scmp.eq.s32.totalorder %s19, 0
      %p60 = por %p58, %p59
      %s61 = ssub.s32 %s20, %s32
      %s62 = ssub.s32 %s21, %s28
      %s63 = sor.u32 %s61, %s62
      %p64 = scmp.eq.s32.totalorder %s63, 0
      %s66 = sadd.s32 %s65, 1
      %s67 = scalar_select %p64, %s65, %s66
      %p70 = pneg %p64
      %p71 = scmp.eq.s32.totalorder %s13, 3
      %p72 = por %p70, %p71
      %p73 = scmp.ne.s32.totalorder %s65, %s68
      %p74 = scmp.eq.s32.totalorder %s13, 0
      %p75 = por %p73, %p74
      %p76 = scmp.ne.s32.totalorder %s65, %s68
      %p77 = scmp.eq.s32.totalorder %s18, 3
      %p78 = por %p76, %p77
      %p79 = scmp.ne.s32.totalorder %s68, %s69
      %p80 = scmp.eq.s32.totalorder %s18, 0
      %p81 = por %p79, %p80
      %p82 = scmp.ne.s32.totalorder %s68, %s69
      %p83 = scmp.eq.s32.totalorder %s19, 3
      %p84 = por %p82, %p83
      %p86 = scmp.ne.s32.totalorder %s69, %s85
      %p87 = scmp.eq.s32.totalorder %s19, 0
      %p88 = por %p86, %p87
      %s89 = ssub.s32 %s20, %s32
      %p90 = scmp.eq.s32.totalorder %s89, 0
      %s92 = sadd.s32 %s91, 1
      %s93 = scalar_select %p90, %s91, %s92
      %p96 = pneg %p90
      %p97 = scmp.eq.s32.totalorder %s13, 3
      %p98 = por %p96, %p97
      %p99 = scmp.ne.s32.totalorder %s91, %s94
      %p100 = scmp.eq.s32.totalorder %s13, 0
      %p101 = por %p99, %p100
      %p102 = scmp.ne.s32.totalorder %s91, %s94
      %p103 = scmp.eq.s32.totalorder %s18, 3
      %p104 = por %p102, %p103
      %p105 = scmp.ne.s32.totalorder %s94, %s95
      %p106 = scmp.eq.s32.totalorder %s18, 0
      %p107 = por %p105, %p106
      %p108 = scmp.ne.s32.totalorder %s94, %s95
      %p109 = scmp.eq.s32.totalorder %s19, 3
      %p110 = por %p108, %p109
      %p112 = scmp.ne.s32.totalorder %s95, %s111
      %p113 = scmp.eq.s32.totalorder %s19, 0
      %p114 = por %p112, %p113
      %s116 = sadd.s32 %s115, 1
      %p119 = scmp.eq.s32.totalorder %s13, 3
      %p120 = scmp.ne.s32.totalorder %s115, %s117
      %p121 = scmp.eq.s32.totalorder %s13, 0
      %p122 = por %p120, %p121
      %p123 = scmp.ne.s32.totalorder %s115, %s117
      %p124 = scmp.eq.s32.totalorder %s18, 3
      %p125 = por %p123, %p124
      %p126 = scmp.ne.s32.totalorder %s117, %s118
      %p127 = scmp.eq.s32.totalorder %s18, 0
      %p128 = por %p126, %p127
      %p129 = scmp.ne.s32.totalorder %s117, %s118
      %p130 = scmp.eq.s32.totalorder %s19, 3
      %p131 = por %p129, %p130
      %p133 = scmp.ne.s32.totalorder %s118, %s132
      %p134 = scmp.eq.s32.totalorder %s19, 0
      %p135 = por %p133, %p134
      %s136 = ssub.s32 %s20, %s32
      %s137 = ssub.s32 %s21, %s28
      %s138 = sor.u32 %s136, %s137
      %p139 = scmp.eq.s32.totalorder %s138, 0
      %s141 = sadd.s32 %s140, 1
      %s142 = scalar_select %p139, %s140, %s141
      %p145 = pneg %p139
      %p146 = scmp.eq.s32.totalorder %s13, 3
      %p147 = por %p145, %p146
      %p148 = scmp.ne.s32.totalorder %s140, %s143
      %p149 = scmp.eq.s32.totalorder %s13, 0
      %p150 = por %p148, %p149
      %p151 = scmp.ne.s32.totalorder %s140, %s143
      %p152 = scmp.eq.s32.totalorder %s18, 3
      %p153 = por %p151, %p152
      %p154 = scmp.ne.s32.totalorder %s143, %s144
      %p155 = scmp.eq.s32.totalorder %s18, 0
      %p156 = por %p154, %p155
      %p157 = scmp.ne.s32.totalorder %s143, %s144
      %p158 = scmp.eq.s32.totalorder %s19, 3
      %p159 = por %p157, %p158
      %p161 = scmp.ne.s32.totalorder %s144, %s160
      %p162 = scmp.eq.s32.totalorder %s19, 0
      %p163 = por %p161, %p162
      %p164 = scmp.le.s32.totalorder 1, %s13
      %p165 = scmp.lt.s32.totalorder %s13, 5
      %p166 = pnand %p164, %p165
      %p167 = pneg %p166
      // Predicated region
      $region9: #{_lambda_.3} parent=5 // pred_check
        _
      $region10: #{_lambda_.3} parent=5 // pred_check_branch
        %169 = sbr.rel (%p166) target = $region12
      $region11: #{_lambda_.3} parent=5 // pred_region
        %s170 = ssub.s32 %s13, 1
        // Predicated region
        $region13: #{_lambda_.3} parent=11 // pred_check
          %p171 = pneg %p128
        $region14: #{_lambda_.3} parent=11 // pred_check_branch
          %173 = sbr.rel (%p171) target = $region16
        $region15: #{_lambda_.3} parent=11 // pred_region
          _
        $region16: #{_lambda_.3} parent=11 // pred_fallthru
          _
      $region12: #{_lambda_.3} parent=5 // pred_fallthru
        _
      %p174 = scmp.lt.s32.totalorder %s13, 4
      // Predicated region
      $region17: #{_lambda_.3} parent=5 // pred_check
        %p175 = pneg %p174
      $region18: #{_lambda_.3} parent=5 // pred_check_branch
        %177 = sbr.rel (%p175) target = $region20
      $region19: #{_lambda_.3} parent=5 // pred_region
        // Predicated region
        $region21: #{_lambda_.3} parent=19 // pred_check
          %p178 = pneg %p47
        $region22: #{_lambda_.3} parent=19 // pred_check_branch
          %180 = sbr.rel (%p178) target = $region24
        $region23: #{_lambda_.3} parent=19 // pred_region
          %s181 = smul.u32 4, %s21
          %p182 = scmp.lt.s32.totalorder %s20, 1
          %s183 = scalar_select %p182, %s20, 1
          %p184 = scmp.lt.s32.totalorder %s181, 7
          %s185 = scalar_select %p184, %s181, 7
          %s186 = smul.addr %s183, 8
          %s187 = sadd.s32 %s185, %s186
          %s188 = smul.addr %s187, 8
          %s189 = scalar_lea.vmem %s0, %s188
          %s190 = smul.u32 4, %s21
        $region24: #{_lambda_.3} parent=19 // pred_fallthru
          _
        // Predicated region
        $region25: #{_lambda_.3} parent=19 // pred_check
          %p191 = pneg %p75
        $region26: #{_lambda_.3} parent=19 // pred_check_branch
          %193 = sbr.rel (%p191) target = $region28
        $region27: #{_lambda_.3} parent=19 // pred_region
          %s194 = smul.u32 4, %s21
          %p195 = scmp.lt.s32.totalorder %s20, 1
          %s196 = scalar_select %p195, %s20, 1
          %p197 = scmp.lt.s32.totalorder %s194, 7
          %s198 = scalar_select %p197, %s194, 7
          %s199 = smul.addr %s196, 8
          %s200 = sadd.s32 %s198, %s199
          %s201 = smul.addr %s200, 4
          %s202 = scalar_lea.vmem %s1, %s201
          %s203 = smul.u32 4, %s21
        $region28: #{_lambda_.3} parent=19 // pred_fallthru
          _
        // Predicated region
        $region29: #{_lambda_.3} parent=19 // pred_check
          %p204 = pneg %p101
        $region30: #{_lambda_.3} parent=19 // pred_check_branch
          %206 = sbr.rel (%p204) target = $region32
        $region31: #{_lambda_.3} parent=19 // pred_region
          %p207 = scmp.lt.s32.totalorder %s20, 1
          %s208 = scalar_select %p207, %s20, 1
          %s209 = smul.addr %s208, 2
          %s210 = scalar_lea.vmem %s2, %s209
        $region32: #{_lambda_.3} parent=19 // pred_fallthru
          _
      $region20: #{_lambda_.3} parent=5 // pred_fallthru
        _
      %p211 = scmp.le.s32.totalorder 1, %s13
      %p212 = scmp.lt.s32.totalorder %s13, 5
      %p213 = pnand %p211, %p212
      %p214 = pneg %p213
      // Predicated region
      $region33: #{_lambda_.3} parent=5 // pred_check
        _
      $region34: #{_lambda_.3} parent=5 // pred_check_branch
        %216 = sbr.rel (%p213) target = $region36
      $region35: #{_lambda_.3} parent=5 // pred_region
        %s217 = ssub.s32 %s13, 1
        %s218 = smul.u32 4, %s23
        %p219 = scmp.lt.s32.totalorder %s22, 1
        %s220 = scalar_select %p219, %s22, 1
        %p221 = scmp.lt.s32.totalorder %s218, 7
        %s222 = scalar_select %p221, %s218, 7
        %s223 = smul.addr %s220, 8
        %s224 = sadd.s32 %s222, %s223
        %s225 = smul.addr %s224, 8
        %s226 = scalar_lea.vmem %s0, %s225
        %p227 = pneg %p53
        %p228 = pneg %p50
        %s229 = smul.u32 4, %s23
        %p230 = scmp.lt.s32.totalorder %s22, 1
        %s231 = scalar_select %p230, %s22, 1
        %p232 = scmp.lt.s32.totalorder %s229, 7
        %s233 = scalar_select %p232, %s229, 7
        %s234 = smul.addr %s231, 8
        %s235 = sadd.s32 %s233, %s234
        %s236 = smul.addr %s235, 4
        %s237 = scalar_lea.vmem %s1, %s236
        %p238 = pneg %p81
        %p239 = pneg %p78
        %p240 = scmp.lt.s32.totalorder %s22, 1
        %s241 = scalar_select %p240, %s22, 1
        %s242 = smul.addr %s241, 2
        %s243 = scalar_lea.vmem %s2, %s242
        %p244 = pneg %p107
        %p245 = pneg %p104
        %p246 = pneg %p128
        %p247 = pneg %p125
        %p248 = pneg %p156
        %p249 = pneg %p153
        %s250 = sand.u32 %s143, 1
        %s251 = scalar_lea.sflag [#allocation3], %s250
        %s252 = sand.u32 %s143, 1
        %s253 = smul.addr %s252, 32
        %s254 = scalar_lea.vmem [#allocation2], %s253
        %s255 = smul.u32 4, %s23
        %p256 = scmp.lt.s32.totalorder %s22, 1
        %s257 = scalar_select %p256, %s22, 1
        %p258 = scmp.lt.s32.totalorder %s255, 7
        %s259 = scalar_select %p258, %s255, 7
        %s260 = smul.addr %s257, 8
        %s261 = sadd.s32 %s259, %s260
        %s262 = smul.addr %s261, 8
        %s263 = scalar_lea.vmem %s0, %s262
        %s264 = smul.u32 4, %s23
        %s265 = smul.u32 4, %s23
        %p266 = scmp.lt.s32.totalorder %s22, 1
        %s267 = scalar_select %p266, %s22, 1
        %p268 = scmp.lt.s32.totalorder %s265, 7
        %s269 = scalar_select %p268, %s265, 7
        %s270 = smul.addr %s267, 8
        %s271 = sadd.s32 %s269, %s270
        %s272 = smul.addr %s271, 4
        %s273 = scalar_lea.vmem %s1, %s272
        %s274 = smul.u32 4, %s23
        %p275 = scmp.lt.s32.totalorder %s22, 1
        %s276 = scalar_select %p275, %s22, 1
        %s277 = smul.addr %s276, 2
        %s278 = scalar_lea.vmem %s2, %s277
        %s279 = smul.u32 4, %s23
        %v281 = vld [vmem:[%s273] sm:$0xf]
        %v282 = vld [vmem:[%s273 + $0x4] sm:$0xf]
        %v283 = vld [vmem:[%s273 + $0x8] sm:$0xf]
        %v284 = vld [vmem:[%s273 + $0xc] sm:$0xf]
        %v285 = vunpack.c.l.bf16 %v281
        %v286 = vunpack.c.l.bf16 %v282
        %v287 = vunpack.c.l.bf16 %v283
        %v288 = vunpack.c.l.bf16 %v284
        %v289 = vld [vmem:[%s278] sm:$0x3]
        %v290 = vlaneseq
        %v291 = vshrl.u32 %v290, 7
        %v292 = vsub.s32 0, %v291
        %v293 = vrot.slane %v289, %v292
        %v294 = vmul.f32 %v285, %v293
        %v295 = vmul.f32 %v286, %v293
        %v296 = vmul.f32 %v287, %v293
        %v297 = vmul.f32 %v288, %v293
        %v298 = vlaneseq
        %v299 = vshrl.u32 %v298, 7
        %v300 = vsub.s32 1, %v299
        %v301 = vrot.slane %v289, %v300
        %v302 = vadd.f32 %v294, %v301
        %v303 = vadd.f32 %v295, %v301
        %v304 = vadd.f32 %v296, %v301
        %v305 = vadd.f32 %v297, %v301
        %v306 = vxor.u32 %v302, 2147483648
        %v307 = vxor.u32 %v303, 2147483648
        %v308 = vxor.u32 %v304, 2147483648
        %v309 = vxor.u32 %v305, 2147483648
        %v310 = vmul.f32 %v306, 1.442695
        %v311 = vpow.pop %v310
        %v312 = vmul.f32 %v307, 1.442695
        %v313 = vpow.pop %v312
        %v314 = vmul.f32 %v308, 1.442695
        %v315 = vpow.pop %v314
        %v316 = vmul.f32 %v309, 1.442695
        %v317 = vpow.pop %v316
        %v318 = vadd.f32 %v311, 1.0
        %v319 = vadd.f32 %v313, 1.0
        %v320 = vadd.f32 %v315, 1.0
        %v321 = vadd.f32 %v317, 1.0
        %v322 = vrcp.pop %v318
        %v323 = vmul.f32 1.0, %v322
        %v324 = vrcp.pop %v319
        %v325 = vmul.f32 1.0, %v324
        %v326 = vrcp.pop %v320
        %v327 = vmul.f32 1.0, %v326
        %v328 = vrcp.pop %v321
        %v329 = vmul.f32 1.0, %v328
        %v330 = vmul.f32 %v302, %v323
        %v331 = vmul.f32 %v303, %v325
        %v332 = vmul.f32 %v304, %v327
        %v333 = vmul.f32 %v305, %v329
        %v334 = vpack.c.bf16 %v331, %v330
        %v335 = vpack.c.bf16 %v333, %v332
        %v336 = vld [vmem:[%s3] sm:$0xf]
        %v337 = vld [vmem:[%s3 + $0x4] sm:$0xf]
        %v338 = vld [vmem:[%s3 + $0x8] sm:$0xf]
        %v339 = vld [vmem:[%s3 + $0xc] sm:$0xf]
        %v340 = vld [vmem:[%s3 + $0x10] sm:$0xf]
        %v341 = vld [vmem:[%s3 + $0x14] sm:$0xf]
        %v342 = vld [vmem:[%s3 + $0x18] sm:$0xf]
        %v343 = vld [vmem:[%s3 + $0x1c] sm:$0xf]
        %v344 = vld [vmem:[%s3 + $0x20] sm:$0xf]
        %v345 = vld [vmem:[%s3 + $0x24] sm:$0xf]
        %v346 = vld [vmem:[%s3 + $0x28] sm:$0xf]
        %v347 = vld [vmem:[%s3 + $0x2c] sm:$0xf]
        %v348 = vld [vmem:[%s3 + $0x30] sm:$0xf]
        %v349 = vld [vmem:[%s3 + $0x34] sm:$0xf]
        %v350 = vld [vmem:[%s3 + $0x38] sm:$0xf]
        %v351 = vld [vmem:[%s3 + $0x3c] sm:$0xf]
        %v368 = vunpack.c.l.b16 %v336
        %v369 = vunpack.c.l.b16 %v337
        %v370 = vunpack.c.l.b16 %v338
        %v371 = vunpack.c.l.b16 %v339
        %v372 = vunpack.c.l.b16 %v340
        %v373 = vunpack.c.l.b16 %v341
        %v374 = vunpack.c.l.b16 %v342
        %v375 = vunpack.c.l.b16 %v343
        %v376 = vunpack.c.l.b16 %v344
        %v377 = vunpack.c.l.b16 %v345
        %v378 = vunpack.c.l.b16 %v346
        %v379 = vunpack.c.l.b16 %v347
        %v380 = vunpack.c.l.b16 %v348
        %v381 = vunpack.c.l.b16 %v349
        %v382 = vunpack.c.l.b16 %v350
        %v383 = vunpack.c.l.b16 %v351
        %v384 = vpack.c.b16 %v369, %v368
        %v385 = vpack.c.b16 %v371, %v370
        %v386 = vpack.c.b16 %v373, %v372
        %v387 = vpack.c.b16 %v375, %v374
        %v388 = vpack.c.b16 %v377, %v376
        %v389 = vpack.c.b16 %v379, %v378
        %v390 = vpack.c.b16 %v381, %v380
        %v391 = vpack.c.b16 %v383, %v382
        %400 = vmatprep.subr.bf16.mxu0 0
        %401 = vmatpush1.bf16.msra.mxu0 %v391
        %402 = vmatprep.subr.bf16.mxu0 0
        %403 = vmatpush1.bf16.msra.mxu0 %v390
        %404 = vmatprep.subr.bf16.mxu0 0
        %405 = vmatpush1.bf16.msra.mxu0 %v389
        %406 = vmatprep.subr.bf16.mxu0 0
        %407 = vmatpush1.bf16.msra.mxu0 %v388
        %408 = vmatprep.subr.bf16.mxu0 0
        %409 = vmatpush1.bf16.msra.mxu0 %v387
        %410 = vmatprep.subr.bf16.mxu0 0
        %411 = vmatpush1.bf16.msra.mxu0 %v386
        %412 = vmatprep.subr.bf16.mxu0 0
        %413 = vmatpush1.bf16.msra.mxu0 %v385
        %414 = vmatprep.subr.bf16.mxu0 0
        %415 = vmatpush1.bf16.msra.mxu0 %v384
        %416 = vmatprep.subr.bf16.mxu0 0
        %417 = vmatpush2.bf16.msra.mxu0 0
        %418 = vmatprep.subr.bf16.mxu0 0
        %419 = vmatpush2.bf16.msra.mxu0 0
        %420 = vmatprep.subr.bf16.mxu0 0
        %421 = vmatpush2.bf16.msra.mxu0 0
        %422 = vmatprep.subr.bf16.mxu0 0
        %423 = vmatpush2.bf16.msra.mxu0 0
        %424 = vmatprep.subr.bf16.mxu0 0
        %425 = vmatpush2.bf16.msra.mxu0 0
        %426 = vmatprep.subr.bf16.mxu0 0
        %427 = vmatpush2.bf16.msra.mxu0 0
        %428 = vmatprep.subr.bf16.mxu0 0
        %429 = vmatpush2.bf16.msra.mxu0 0
        %430 = vmatprep.subr.bf16.mxu0 0
        %431 = vmatpush2.bf16.msra.mxu0 0
        %432 = vmatprep.mubr.bf16.mxu0 0
        %433 = vmatmul.mubr.bf16.gmra.mxu0 %v334
        %v434 = vpop.f32.mrf.mxu0
        %v435 = vadd.f32 0.0, %v434
        %v436 = vpop.f32.mrf.mxu0
        %v437 = vpop.f32.mrf.mxu0
        %v438 = vadd.f32 0.0, %v437
        %v439 = vpop.f32.mrf.mxu0
        %440 = vmatprep.mubr.bf16.mxu0 0
        %441 = vmatmul.mubr.bf16.gmra.mxu0 %v335
        %v442 = vpop.f32.mrf.mxu0
        %v443 = vadd.f32 0.0, %v442
        %v444 = vpop.f32.mrf.mxu0
        %v445 = vpop.f32.mrf.mxu0
        %v446 = vadd.f32 0.0, %v445
        %v447 = vpop.f32.mrf.mxu0
        %448 = vdwg.mxu0
        %v449 = vld [vmem:[%s263] sm:$0xff]
        %v450 = vld [vmem:[%s263 + $0x8] sm:$0xff]
        %v451 = vld [vmem:[%s263 + $0x10] sm:$0xff]
        %v452 = vld [vmem:[%s263 + $0x18] sm:$0xff]
        %v453 = vadd.f32 %v449, %v435
        %v454 = vadd.f32 %v450, %v438
        %v455 = vadd.f32 %v451, %v443
        %v456 = vadd.f32 %v452, %v446
        %457 = vst [vmem:[%s254] sm:$0xff] %v453
        %458 = vst [vmem:[%s254 + $0x8] sm:$0xff] %v454
        %459 = vst [vmem:[%s254 + $0x10] sm:$0xff] %v455
        %460 = vst [vmem:[%s254 + $0x18] sm:$0xff] %v456
        %s461 = sand.u32 %s143, 1
        %s462 = scalar_lea.sflag [#allocation3], %s461
        %s463 = sand.u32 %s143, 1
        %s464 = smul.addr %s463, 32
        %s465 = scalar_lea.vmem [#allocation2], %s464
        // Predicated region
        $region37: #{_lambda_.3} parent=35 // pred_check
          %p466 = pneg %p153
        $region38: #{_lambda_.3} parent=35 // pred_check_branch
          %468 = sbr.rel (%p466) target = $region40
        $region39: #{_lambda_.3} parent=35 // pred_region
          %s469 = smul.u32 4, %s23
          %s471 = ssub.s32 512, 512
          %472 = vsyncadd %s462, %s471
          %s473 = smul.addr %s22, 8
          %s474 = sadd.s32 %s469, %s473
          %s475 = smul.addr %s474, 128
          %s476 = scalar_lea.hbm %s4, %s475
          %s477 = sshll.u32 %s465, 4
          %s478 = int_to_ptr.vmem [resolvable:$true] %s477
          %483 = dma.vmem_to_hbm [thread:$0]  %s478, 512, %s476, %s462, 128, 128, 8
        $region40: #{_lambda_.3} parent=35 // pred_fallthru
          _
      $region36: #{_lambda_.3} parent=5 // pred_fallthru
        _
      %p484 = scmp.le.s32.totalorder 2, %s13
      // Predicated region
      $region41: #{_lambda_.3} parent=5 // pred_check
        %p485 = pneg %p484
      $region42: #{_lambda_.3} parent=5 // pred_check_branch
        %487 = sbr.rel (%p485) target = $region44
      $region43: #{_lambda_.3} parent=5 // pred_region
        %s488 = ssub.s32 %s13, 2
        // Predicated region
        $region45: #{_lambda_.3} parent=43 // pred_check
          %p489 = pneg %p159
        $region46: #{_lambda_.3} parent=43 // pred_check_branch
          %491 = sbr.rel (%p489) target = $region48
        $region47: #{_lambda_.3} parent=43 // pred_region
          %s492 = sand.u32 %s144, 1
          %s493 = scalar_lea.sflag [#allocation3], %s492
          %s494 = sand.u32 %s144, 1
          %s495 = smul.addr %s494, 32
          %s496 = scalar_lea.vmem [#allocation2], %s495
          %497 = dma.done %s493, 512
        $region48: #{_lambda_.3} parent=43 // pred_fallthru
          _
      $region44: #{_lambda_.3} parent=5 // pred_fallthru
        _
    $region6: #{_lambda_.3} parent=1 // loop_footer
      %s17 = sadd.s32 1, %s13
    $region7: #{_lambda_.3} parent=1 // loop_footer_branch
      %12 = sbr.rel target = $region3
    $region8: #{_lambda_.3} parent=1 // loop_exit
      _
    %498 = vsyncpa [#allocation3], 1
    %s499 = scalar_lea.sflag [#allocation3], 1
    %500 = vsyncpa %s499, 1

// kernel: _lambda_.2
$region0: #{_lambda_.2}
  #allocation0 [shape = 'u32[]', space=smem, size = 0x4, offset = 0x4, fixed_abs, tag = 'smem constant byte address 0x4 - core index']
  #allocation1 [shape = 'u32[144,128]{1,0:T(1,128)}', space=vmem, size = 0x12000, scoped, tag = 'internal scratch']
  %s0 = inlined_call_operand.vmem [shape: f32[2,2,36,128], index: 0, kind: input, shape index: {}]
  %s1 = inlined_call_operand.vmem [shape: f32[2,36,1], index: 1, kind: input, shape index: {}]
  %s2 = inlined_call_operand.vmem [shape: f32[2,2,128], index: 2, kind: input, shape index: {}]
  %s3 = inlined_call_operand.vmem [shape: bf16[384,256], index: 3, kind: input, shape index: {}]
  %s4 = inlined_call_operand.vmem [shape: f32[3,1,128], index: 4, kind: input, shape index: {}]
  %s5 = inlined_call_operand.vmem [shape: bf16[2,64,128], index: 5, kind: output, shape index: {0}]
  %s6 = inlined_call_operand.vmem [shape: f32[2,2,2,128], index: 6, kind: output, shape index: {1}]
  %7 = xla_tuple %s5, %s6
  %s8 = sld [smem:[#allocation0]]
  $region61: #{_lambda_.2} parent=0
    _
  %s10 = ssub.s32 1, %s8
  %s11 = scalar_select 0, %s10, %s8
  loop: start=0, step=1, limit=6
  $region2: #{_lambda_.2} parent=0 // loop_pre_header
    _
  $region3: #{_lambda_.2} parent=0 // loop_header
    %s13 = sphi 0, %s17
    %p14 = scmp.ge.s32.totalorder %s13, 6
    %s20 = sphi 0, %s32
    %s21 = sphi 0, %s28
    %s22 = sphi 0, %s20
    %s23 = sphi 0, %s21
    %s24 = sphi 0, %s22
    %s25 = sphi 0, %s23
    %s37 = sphi 0, %s39
    %s40 = sphi 0, %s37
    %s41 = sphi 0, %s40
    %s57 = sphi 0, %s41
    %s63 = sphi 0, %s65
    %s66 = sphi 0, %s63
    %s67 = sphi 0, %s66
    %s83 = sphi 0, %s67
    %s89 = sphi 0, %s91
    %s92 = sphi 0, %s89
    %s93 = sphi 0, %s92
    %s109 = sphi 0, %s93
    %s113 = sphi 0, %s113
    %s115 = sphi 0, %s113
    %s116 = sphi 0, %s115
    %s130 = sphi 0, %s116
    %s134 = sphi 0, %s134
    %s136 = sphi 0, %s134
    %s137 = sphi 0, %s136
    %s151 = sphi 0, %s137
    %s159 = sphi 0, %s161
    %s162 = sphi 0, %s159
    %s163 = sphi 0, %s162
    %s179 = sphi 0, %s163
    %s187 = sphi 0, %s189
    %s190 = sphi 0, %s187
    %s191 = sphi 0, %s190
    %s207 = sphi 0, %s191
  $region4: #{_lambda_.2} parent=0 // loop_header_branch
    %16 = sbr.rel (%p14) target = $region8
  $region5: #{_lambda_.2} parent=0 // loop_body
    %s18 = ssub.s32 %s13, 1
    %s19 = ssub.s32 %s13, 2
    %s26 = sadd.s32 1, %s21
    %p27 = scmp.ge.s32.totalorder %s26, 2
    %s28 = scalar_select %p27, 0, %s26
    %s29 = sadd.s32 1, %s20
    %s30 = scalar_select %p27, %s29, %s20
    %p31 = scmp.ge.s32.totalorder %s30, 2
    %s32 = scalar_select %p31, 0, %s30
    %s33 = ssub.s32 %s20, %s32
    %s34 = ssub.s32 %s21, %s28
    %s35 = sor.u32 %s33, %s34
    %p36 = scmp.eq.s32.totalorder %s35, 0
    %s38 = sadd.s32 %s37, 1
    %s39 = scalar_select %p36, %s37, %s38
    %p42 = pneg %p36
    %p43 = scmp.eq.s32.totalorder %s13, 3
    %p44 = por %p42, %p43
    %p45 = scmp.ne.s32.totalorder %s37, %s40
    %p46 = scmp.eq.s32.totalorder %s13, 0
    %p47 = por %p45, %p46
    %p48 = scmp.ne.s32.totalorder %s37, %s40
    %p49 = scmp.eq.s32.totalorder %s18, 3
    %p50 = por %p48, %p49
    %p51 = scmp.ne.s32.totalorder %s40, %s41
    %p52 = scmp.eq.s32.totalorder %s18, 0
    %p53 = por %p51, %p52
    %p54 = scmp.ne.s32.totalorder %s40, %s41
    %p55 = scmp.eq.s32.totalorder %s19, 3
    %p56 = por %p54, %p55
    %p58 = scmp.ne.s32.totalorder %s41, %s57
    %p59 = scmp.eq.s32.totalorder %s19, 0
    %p60 = por %p58, %p59
    %s61 = ssub.s32 %s21, %s28
    %p62 = scmp.eq.s32.totalorder %s61, 0
    %s64 = sadd.s32 %s63, 1
    %s65 = scalar_select %p62, %s63, %s64
    %p68 = pneg %p62
    %p69 = scmp.eq.s32.totalorder %s13, 3
    %p70 = por %p68, %p69
    %p71 = scmp.ne.s32.totalorder %s63, %s66
    %p72 = scmp.eq.s32.totalorder %s13, 0
    %p73 = por %p71, %p72
    %p74 = scmp.ne.s32.totalorder %s63, %s66
    %p75 = scmp.eq.s32.totalorder %s18, 3
    %p76 = por %p74, %p75
    %p77 = scmp.ne.s32.totalorder %s66, %s67
    %p78 = scmp.eq.s32.totalorder %s18, 0
    %p79 = por %p77, %p78
    %p80 = scmp.ne.s32.totalorder %s66, %s67
    %p81 = scmp.eq.s32.totalorder %s19, 3
    %p82 = por %p80, %p81
    %p84 = scmp.ne.s32.totalorder %s67, %s83
    %p85 = scmp.eq.s32.totalorder %s19, 0
    %p86 = por %p84, %p85
    %s87 = ssub.s32 %s20, %s32
    %p88 = scmp.eq.s32.totalorder %s87, 0
    %s90 = sadd.s32 %s89, 1
    %s91 = scalar_select %p88, %s89, %s90
    %p94 = pneg %p88
    %p95 = scmp.eq.s32.totalorder %s13, 3
    %p96 = por %p94, %p95
    %p97 = scmp.ne.s32.totalorder %s89, %s92
    %p98 = scmp.eq.s32.totalorder %s13, 0
    %p99 = por %p97, %p98
    %p100 = scmp.ne.s32.totalorder %s89, %s92
    %p101 = scmp.eq.s32.totalorder %s18, 3
    %p102 = por %p100, %p101
    %p103 = scmp.ne.s32.totalorder %s92, %s93
    %p104 = scmp.eq.s32.totalorder %s18, 0
    %p105 = por %p103, %p104
    %p106 = scmp.ne.s32.totalorder %s92, %s93
    %p107 = scmp.eq.s32.totalorder %s19, 3
    %p108 = por %p106, %p107
    %p110 = scmp.ne.s32.totalorder %s93, %s109
    %p111 = scmp.eq.s32.totalorder %s19, 0
    %p112 = por %p110, %p111
    %s114 = sadd.s32 %s113, 1
    %p117 = scmp.eq.s32.totalorder %s13, 3
    %p118 = scmp.ne.s32.totalorder %s113, %s115
    %p119 = scmp.eq.s32.totalorder %s13, 0
    %p120 = por %p118, %p119
    %p121 = scmp.ne.s32.totalorder %s113, %s115
    %p122 = scmp.eq.s32.totalorder %s18, 3
    %p123 = por %p121, %p122
    %p124 = scmp.ne.s32.totalorder %s115, %s116
    %p125 = scmp.eq.s32.totalorder %s18, 0
    %p126 = por %p124, %p125
    %p127 = scmp.ne.s32.totalorder %s115, %s116
    %p128 = scmp.eq.s32.totalorder %s19, 3
    %p129 = por %p127, %p128
    %p131 = scmp.ne.s32.totalorder %s116, %s130
    %p132 = scmp.eq.s32.totalorder %s19, 0
    %p133 = por %p131, %p132
    %s135 = sadd.s32 %s134, 1
    %p138 = scmp.eq.s32.totalorder %s13, 3
    %p139 = scmp.ne.s32.totalorder %s134, %s136
    %p140 = scmp.eq.s32.totalorder %s13, 0
    %p141 = por %p139, %p140
    %p142 = scmp.ne.s32.totalorder %s134, %s136
    %p143 = scmp.eq.s32.totalorder %s18, 3
    %p144 = por %p142, %p143
    %p145 = scmp.ne.s32.totalorder %s136, %s137
    %p146 = scmp.eq.s32.totalorder %s18, 0
    %p147 = por %p145, %p146
    %p148 = scmp.ne.s32.totalorder %s136, %s137
    %p149 = scmp.eq.s32.totalorder %s19, 3
    %p150 = por %p148, %p149
    %p152 = scmp.ne.s32.totalorder %s137, %s151
    %p153 = scmp.eq.s32.totalorder %s19, 0
    %p154 = por %p152, %p153
    %s155 = ssub.s32 %s20, %s32
    %s156 = ssub.s32 %s21, %s28
    %s157 = sor.u32 %s155, %s156
    %p158 = scmp.eq.s32.totalorder %s157, 0
    %s160 = sadd.s32 %s159, 1
    %s161 = scalar_select %p158, %s159, %s160
    %p164 = pneg %p158
    %p165 = scmp.eq.s32.totalorder %s13, 3
    %p166 = por %p164, %p165
    %p167 = scmp.ne.s32.totalorder %s159, %s162
    %p168 = scmp.eq.s32.totalorder %s13, 0
    %p169 = por %p167, %p168
    %p170 = scmp.ne.s32.totalorder %s159, %s162
    %p171 = scmp.eq.s32.totalorder %s18, 3
    %p172 = por %p170, %p171
    %p173 = scmp.ne.s32.totalorder %s162, %s163
    %p174 = scmp.eq.s32.totalorder %s18, 0
    %p175 = por %p173, %p174
    %p176 = scmp.ne.s32.totalorder %s162, %s163
    %p177 = scmp.eq.s32.totalorder %s19, 3
    %p178 = por %p176, %p177
    %p180 = scmp.ne.s32.totalorder %s163, %s179
    %p181 = scmp.eq.s32.totalorder %s19, 0
    %p182 = por %p180, %p181
    %s183 = ssub.s32 %s20, %s32
    %s184 = ssub.s32 %s21, %s28
    %s185 = sor.u32 %s183, %s184
    %p186 = scmp.eq.s32.totalorder %s185, 0
    %s188 = sadd.s32 %s187, 1
    %s189 = scalar_select %p186, %s187, %s188
    %p192 = pneg %p186
    %p193 = scmp.eq.s32.totalorder %s13, 3
    %p194 = por %p192, %p193
    %p195 = scmp.ne.s32.totalorder %s187, %s190
    %p196 = scmp.eq.s32.totalorder %s13, 0
    %p197 = por %p195, %p196
    %p198 = scmp.ne.s32.totalorder %s187, %s190
    %p199 = scmp.eq.s32.totalorder %s18, 3
    %p200 = por %p198, %p199
    %p201 = scmp.ne.s32.totalorder %s190, %s191
    %p202 = scmp.eq.s32.totalorder %s18, 0
    %p203 = por %p201, %p202
    %p204 = scmp.ne.s32.totalorder %s190, %s191
    %p205 = scmp.eq.s32.totalorder %s19, 3
    %p206 = por %p204, %p205
    %p208 = scmp.ne.s32.totalorder %s191, %s207
    %p209 = scmp.eq.s32.totalorder %s19, 0
    %p210 = por %p208, %p209
    %p211 = scmp.le.s32.totalorder 1, %s13
    %p212 = scmp.lt.s32.totalorder %s13, 5
    %p213 = pnand %p211, %p212
    %p214 = pneg %p213
    // Predicated region
    $region9: #{_lambda_.2} parent=5 // pred_check
      _
    $region10: #{_lambda_.2} parent=5 // pred_check_branch
      %216 = sbr.rel (%p213) target = $region12
    $region11: #{_lambda_.2} parent=5 // pred_region
      %s217 = ssub.s32 %s13, 1
      // Predicated region
      $region13: #{_lambda_.2} parent=11 // pred_check
        %p218 = pneg %p126
      $region14: #{_lambda_.2} parent=11 // pred_check_branch
        %220 = sbr.rel (%p218) target = $region16
      $region15: #{_lambda_.2} parent=11 // pred_region
        _
      $region16: #{_lambda_.2} parent=11 // pred_fallthru
        _
      // Predicated region
      $region17: #{_lambda_.2} parent=11 // pred_check
        %p221 = pneg %p147
      $region18: #{_lambda_.2} parent=11 // pred_check_branch
        %223 = sbr.rel (%p221) target = $region20
      $region19: #{_lambda_.2} parent=11 // pred_region
        _
      $region20: #{_lambda_.2} parent=11 // pred_fallthru
        _
    $region12: #{_lambda_.2} parent=5 // pred_fallthru
      _
    %p224 = scmp.lt.s32.totalorder %s13, 4
    // Predicated region
    $region21: #{_lambda_.2} parent=5 // pred_check
      %p225 = pneg %p224
    $region22: #{_lambda_.2} parent=5 // pred_check_branch
      %227 = sbr.rel (%p225) target = $region24
    $region23: #{_lambda_.2} parent=5 // pred_region
      // Predicated region
      $region25: #{_lambda_.2} parent=23 // pred_check
        %p228 = pneg %p47
      $region26: #{_lambda_.2} parent=23 // pred_check_branch
        %230 = sbr.rel (%p228) target = $region28
      $region27: #{_lambda_.2} parent=23 // pred_region
        %p231 = scmp.lt.s32.totalorder %s20, 1
        %s232 = scalar_select %p231, %s20, 1
        %p233 = scmp.lt.s32.totalorder %s21, 1
        %s234 = scalar_select %p233, %s21, 1
        %s235 = smul.addr %s234, 5
        %s236 = smul.addr %s232, 10
        %s237 = sadd.s32 %s235, %s236
        %s238 = smul.addr %s237, 8
        %s239 = scalar_lea.vmem %s0, %s238
      $region28: #{_lambda_.2} parent=23 // pred_fallthru
        _
      // Predicated region
      $region29: #{_lambda_.2} parent=23 // pred_check
        %p240 = pneg %p73
      $region30: #{_lambda_.2} parent=23 // pred_check_branch
        %242 = sbr.rel (%p240) target = $region32
      $region31: #{_lambda_.2} parent=23 // pred_region
        %p243 = scmp.lt.s32.totalorder %s21, 1
        %s244 = scalar_select %p243, %s21, 1
        %s245 = smul.addr %s244, 5
        %s246 = smul.addr %s245, 8
        %s247 = scalar_lea.vmem %s1, %s246
      $region32: #{_lambda_.2} parent=23 // pred_fallthru
        _
      // Predicated region
      $region33: #{_lambda_.2} parent=23 // pred_check
        %p248 = pneg %p99
      $region34: #{_lambda_.2} parent=23 // pred_check_branch
        %250 = sbr.rel (%p248) target = $region36
      $region35: #{_lambda_.2} parent=23 // pred_region
        %p251 = scmp.lt.s32.totalorder %s20, 1
        %s252 = scalar_select %p251, %s20, 1
        %s253 = smul.addr %s252, 2
        %s254 = scalar_lea.vmem %s2, %s253
      $region36: #{_lambda_.2} parent=23 // pred_fallthru
        _
    $region24: #{_lambda_.2} parent=5 // pred_fallthru
      _
    %p255 = scmp.le.s32.totalorder 1, %s13
    %p256 = scmp.lt.s32.totalorder %s13, 5
    %p257 = pnand %p255, %p256
    %p258 = pneg %p257
    // Predicated region
    $region37: #{_lambda_.2} parent=5 // pred_check
      _
    $region38: #{_lambda_.2} parent=5 // pred_check_branch
      %260 = sbr.rel (%p257) target = $region40
    $region39: #{_lambda_.2} parent=5 // pred_region
      %s261 = ssub.s32 %s13, 1
      %p262 = scmp.lt.s32.totalorder %s22, 1
      %s263 = scalar_select %p262, %s22, 1
      %p264 = scmp.lt.s32.totalorder %s23, 1
      %s265 = scalar_select %p264, %s23, 1
      %s266 = smul.addr %s265, 5
      %s267 = smul.addr %s263, 10
      %s268 = sadd.s32 %s266, %s267
      %s269 = smul.addr %s268, 8
      %s270 = scalar_lea.vmem %s0, %s269
      %p271 = pneg %p53
      %p272 = pneg %p50
      %p273 = scmp.lt.s32.totalorder %s23, 1
      %s274 = scalar_select %p273, %s23, 1
      %s275 = smul.addr %s274, 5
      %s276 = smul.addr %s275, 8
      %s277 = scalar_lea.vmem %s1, %s276
      %p278 = pneg %p79
      %p279 = pneg %p76
      %p280 = scmp.lt.s32.totalorder %s22, 1
      %s281 = scalar_select %p280, %s22, 1
      %s282 = smul.addr %s281, 2
      %s283 = scalar_lea.vmem %s2, %s282
      %p284 = pneg %p105
      %p285 = pneg %p102
      %p286 = pneg %p126
      %p287 = pneg %p123
      %p288 = pneg %p147
      %p289 = pneg %p144
      %p290 = pneg %p175
      %p291 = pneg %p172
      %s292 = smul.u32 4, %s23
      %p293 = scmp.lt.s32.totalorder %s22, 1
      %s294 = scalar_select %p293, %s22, 1
      %p295 = scmp.lt.s32.totalorder %s292, 7
      %s296 = scalar_select %p295, %s292, 7
      %s297 = smul.addr %s294, 8
      %s298 = sadd.s32 %s296, %s297
      %s299 = smul.addr %s298, 4
      %s300 = scalar_lea.vmem %s5, %s299
      %p301 = pneg %p203
      %p302 = pneg %p200
      %p303 = scmp.lt.s32.totalorder %s22, 1
      %s304 = scalar_select %p303, %s22, 1
      %p305 = scmp.lt.s32.totalorder %s23, 1
      %s306 = scalar_select %p305, %s23, 1
      %s307 = smul.addr %s304, 2
      %s308 = sadd.s32 %s306, %s307
      %s309 = smul.addr %s308, 2
      %s310 = scalar_lea.vmem %s6, %s309
      %p311 = scmp.lt.s32.totalorder %s22, 1
      %s312 = scalar_select %p311, %s22, 1
      %p313 = scmp.lt.s32.totalorder %s23, 1
      %s314 = scalar_select %p313, %s23, 1
      %s315 = smul.addr %s314, 5
      %s316 = smul.addr %s312, 10
      %s317 = sadd.s32 %s315, %s316
      %s318 = smul.addr %s317, 8
      %s319 = scalar_lea.vmem %s0, %s318
      %p320 = scmp.lt.s32.totalorder %s23, 1
      %s321 = scalar_select %p320, %s23, 1
      %s322 = smul.addr %s321, 5
      %s323 = smul.addr %s322, 8
      %s324 = scalar_lea.vmem %s1, %s323
      %p325 = scmp.lt.s32.totalorder %s22, 1
      %s326 = scalar_select %p325, %s22, 1
      %s327 = smul.addr %s326, 2
      %s328 = scalar_lea.vmem %s2, %s327
      %s329 = smul.u32 4, %s23
      %p330 = scmp.lt.s32.totalorder %s22, 1
      %s331 = scalar_select %p330, %s22, 1
      %p332 = scmp.lt.s32.totalorder %s329, 7
      %s333 = scalar_select %p332, %s329, 7
      %s334 = smul.addr %s331, 8
      %s335 = sadd.s32 %s333, %s334
      %s336 = smul.addr %s335, 4
      %s337 = scalar_lea.vmem %s5, %s336
      %s338 = smul.u32 4, %s23
      %p339 = scmp.lt.s32.totalorder %s22, 1
      %s340 = scalar_select %p339, %s22, 1
      %p341 = scmp.lt.s32.totalorder %s23, 1
      %s342 = scalar_select %p341, %s23, 1
      %s343 = smul.addr %s340, 2
      %s344 = sadd.s32 %s342, %s343
      %s345 = smul.addr %s344, 2
      %s346 = scalar_lea.vmem %s6, %s345
      %v348 = vld [vmem:[%s319] sm:$0xff]
      %v349 = vld [vmem:[%s319 + $0x8] sm:$0xff]
      %v350 = vld [vmem:[%s319 + $0x10] sm:$0xff]
      %v351 = vld [vmem:[%s319 + $0x18] sm:$0xff]
      %v352 = vld [vmem:[%s319 + $0x20] sm:$0xf]
      %v353 = vld [vmem:[%s324] sm:$0xff]
      %v354 = vld [vmem:[%s324 + $0x8] sm:$0xff]
      %v355 = vld [vmem:[%s324 + $0x10] sm:$0xff]
      %v356 = vld [vmem:[%s324 + $0x18] sm:$0xff]
      %v357 = vld [vmem:[%s324 + $0x20] sm:$0xf]
      %v358 = vld [vmem:[%s328] sm:$0x3]
      %v359 = vlaneseq
      %v360 = vshrl.u32 %v359, 7
      %v361 = vsub.s32 0, %v360
      %v362 = vrot.slane %v358, %v361
      %v363 = vmul.f32 %v348, %v362
      %v364 = vmul.f32 %v349, %v362
      %v365 = vmul.f32 %v350, %v362
      %v366 = vmul.f32 %v351, %v362
      %v367 = vmul.f32 %v352, %v362
      %v368 = vlaneseq
      %v369 = vshrl.u32 %v368, 7
      %v370 = vsub.s32 1, %v369
      %v371 = vrot.slane %v358, %v370
      %v372 = vadd.f32 %v363, %v371
      %v373 = vadd.f32 %v364, %v371
      %v374 = vadd.f32 %v365, %v371
      %v375 = vadd.f32 %v366, %v371
      %v376 = vadd.f32 %v367, %v371
      %378 = vset.pattern.permute.xlu0 0
      %379 = vperm.xlu0 %378, %v353
      %v380 = vpop.permute.xlu0 %379
      %383 = vset.pattern.permute.xlu0 0
      %384 = vperm.xlu0 %383, %v354
      %v385 = vpop.permute.xlu0 %384
      %388 = vset.pattern.permute.xlu0 0
      %389 = vperm.xlu0 %388, %v355
      %v390 = vpop.permute.xlu0 %389
      %393 = vset.pattern.permute.xlu0 0
      %394 = vperm.xlu0 %393, %v356
      %v395 = vpop.permute.xlu0 %394
      %398 = vset.pattern.permute.xlu0 0
      %399 = vperm.xlu0 %398, %v357
      %v400 = vpop.permute.xlu0 %399
      %v402 = vmul.f32 %v372, %v380
      %v403 = vmul.f32 %v373, %v385
      %v404 = vmul.f32 %v374, %v390
      %v405 = vmul.f32 %v375, %v395
      %v406 = vmul.f32 %v376, %v400
      %v407 = vpack.c.bf16 %v403, %v402
      %v408 = vpack.c.bf16 %v405, %v404
      %v409 = vpack.c.bf16 %v406, %v406
      %vm410 = vsmask.f32 7424
      %v412 = vshrl.u32 %v407, 16
      %v414 = vshll.u32 %v407, 16
      %v416 = vrot.slane %v414, 1
      %v417 = vor.u32 %v412, %v416
      %v419 = vshll.u32 %v408, 16
      %v421 = vrot.slane %v419, 1
      %v422 = vsel %vm410, %v417, %v421
      %v423 = vshrl.u32 %v408, 16
      %v425 = vor.u32 %v423, %v421
      %v427 = vshll.u32 %v409, 16
      %v429 = vrot.slane %v427, 1
      %v430 = vsel %vm410, %v425, %v429
      %v431 = vshrl.u32 %v409, 16
      %v433 = vor.u32 %v431, %v429
      %vm440 = vcmask 1046528
      %v441 = vrot.slane %v407, 1
      %v442 = vrot.slane %v408, 1
      %v443 = vsel %vm440, %v441, %v442
      %v444 = vrot.slane %v409, 1
      %v445 = vsel %vm440, %v442, %v444
      %v449 = vld [vmem:[%s3] sm:$0xff]
      %v450 = vld [vmem:[%s3 + $0x8] sm:$0xff]
      %v451 = vld [vmem:[%s3 + $0x10] sm:$0xff]
      %v452 = vld [vmem:[%s3 + $0x18] sm:$0xff]
      %v453 = vld [vmem:[%s3 + $0x20] sm:$0xff]
      %v454 = vld [vmem:[%s3 + $0x28] sm:$0xff]
      %v455 = vld [vmem:[%s3 + $0x30] sm:$0xff]
      %v456 = vld [vmem:[%s3 + $0x38] sm:$0xff]
      %v457 = vld [vmem:[%s3 + $0x40] sm:$0xff]
      %v458 = vld [vmem:[%s3 + $0x48] sm:$0xff]
      %v459 = vld [vmem:[%s3 + $0x50] sm:$0xff]
      %v460 = vld [vmem:[%s3 + $0x58] sm:$0xff]
      %v461 = vld [vmem:[%s3 + $0x60] sm:$0xff]
      %v462 = vld [vmem:[%s3 + $0x68] sm:$0xff]
      %v463 = vld [vmem:[%s3 + $0x70] sm:$0xff]
      %v464 = vld [vmem:[%s3 + $0x78] sm:$0xff]
      %v465 = vld [vmem:[%s3 + $0x80] sm:$0xff]
      %v466 = vld [vmem:[%s3 + $0x88] sm:$0xff]
      %v467 = vld [vmem:[%s3 + $0x90] sm:$0xff]
      %v468 = vld [vmem:[%s3 + $0x98] sm:$0xff]
      %v469 = vld [vmem:[%s3 + $0xa0] sm:$0xff]
      %v470 = vld [vmem:[%s3 + $0xa8] sm:$0xff]
      %v471 = vld [vmem:[%s3 + $0xb0] sm:$0xff]
      %v472 = vld [vmem:[%s3 + $0xb8] sm:$0xff]
      %v473 = vld [vmem:[%s3 + $0xc0] sm:$0xff]
      %v474 = vld [vmem:[%s3 + $0xc8] sm:$0xff]
      %v475 = vld [vmem:[%s3 + $0xd0] sm:$0xff]
      %v476 = vld [vmem:[%s3 + $0xd8] sm:$0xff]
      %v477 = vld [vmem:[%s3 + $0xe0] sm:$0xff]
      %v478 = vld [vmem:[%s3 + $0xe8] sm:$0xff]
      %v479 = vld [vmem:[%s3 + $0xf0] sm:$0xff]
      %v480 = vld [vmem:[%s3 + $0xf8] sm:$0xff]
      %v481 = vld [vmem:[%s3 + $0x100] sm:$0xff]
      %v482 = vld [vmem:[%s3 + $0x108] sm:$0xff]
      %v483 = vld [vmem:[%s3 + $0x110] sm:$0xff]
      %v484 = vld [vmem:[%s3 + $0x118] sm:$0xff]
      %v485 = vld [vmem:[%s3 + $0x120] sm:$0xff]
      %v486 = vld [vmem:[%s3 + $0x128] sm:$0xff]
      %v487 = vld [vmem:[%s3 + $0x130] sm:$0xff]
      %v488 = vld [vmem:[%s3 + $0x138] sm:$0xff]
      %v489 = vld [vmem:[%s3 + $0x140] sm:$0xff]
      %v490 = vld [vmem:[%s3 + $0x148] sm:$0xff]
      %v491 = vld [vmem:[%s3 + $0x150] sm:$0xff]
      %v492 = vld [vmem:[%s3 + $0x158] sm:$0xff]
      %v493 = vld [vmem:[%s3 + $0x160] sm:$0xff]
      %v494 = vld [vmem:[%s3 + $0x168] sm:$0xff]
      %v495 = vld [vmem:[%s3 + $0x170] sm:$0xff]
      %v496 = vld [vmem:[%s3 + $0x178] sm:$0xff]
      %v545 = vunpack.c.l.b16 %v449
      %v546 = vunpack.c.h.b16 %v449
      %v547 = vunpack.c.l.b16 %v450
      %v548 = vunpack.c.h.b16 %v450
      %v549 = vunpack.c.l.b16 %v451
      %v550 = vunpack.c.h.b16 %v451
      %v551 = vunpack.c.l.b16 %v452
      %v552 = vunpack.c.h.b16 %v452
      %v553 = vunpack.c.l.b16 %v453
      %v554 = vunpack.c.h.b16 %v453
      %v555 = vunpack.c.l.b16 %v454
      %v556 = vunpack.c.h.b16 %v454
      %v557 = vunpack.c.l.b16 %v455
      %v558 = vunpack.c.h.b16 %v455
      %v559 = vunpack.c.l.b16 %v456
      %v560 = vunpack.c.h.b16 %v456
      %v561 = vunpack.c.l.b16 %v457
      %v562 = vunpack.c.h.b16 %v457
      %v563 = vunpack.c.l.b16 %v458
      %v564 = vunpack.c.h.b16 %v458
      %v565 = vunpack.c.l.b16 %v459
      %v566 = vunpack.c.h.b16 %v459
      %v567 = vunpack.c.l.b16 %v460
      %v568 = vunpack.c.h.b16 %v460
      %v569 = vunpack.c.l.b16 %v461
      %v570 = vunpack.c.h.b16 %v461
      %v571 = vunpack.c.l.b16 %v462
      %v572 = vunpack.c.h.b16 %v462
      %v573 = vunpack.c.l.b16 %v463
      %v574 = vunpack.c.h.b16 %v463
      %v575 = vunpack.c.l.b16 %v464
      %v576 = vunpack.c.h.b16 %v464
      %v577 = vunpack.c.l.b16 %v465
      %v578 = vunpack.c.h.b16 %v465
      %v579 = vunpack.c.l.b16 %v466
      %v580 = vunpack.c.h.b16 %v466
      %v581 = vunpack.c.l.b16 %v467
      %v582 = vunpack.c.h.b16 %v467
      %v583 = vunpack.c.l.b16 %v468
      %v584 = vunpack.c.h.b16 %v468
      %v585 = vunpack.c.l.b16 %v469
      %v586 = vunpack.c.h.b16 %v469
      %v587 = vunpack.c.l.b16 %v470
      %v588 = vunpack.c.h.b16 %v470
      %v589 = vunpack.c.l.b16 %v471
      %v590 = vunpack.c.h.b16 %v471
      %v591 = vunpack.c.l.b16 %v472
      %v592 = vunpack.c.h.b16 %v472
      %v593 = vunpack.c.l.b16 %v473
      %v594 = vunpack.c.h.b16 %v473
      %v595 = vunpack.c.l.b16 %v474
      %v596 = vunpack.c.h.b16 %v474
      %v597 = vunpack.c.l.b16 %v475
      %v598 = vunpack.c.h.b16 %v475
      %v599 = vunpack.c.l.b16 %v476
      %v600 = vunpack.c.h.b16 %v476
      %v601 = vunpack.c.l.b16 %v477
      %v602 = vunpack.c.h.b16 %v477
      %v603 = vunpack.c.l.b16 %v478
      %v604 = vunpack.c.h.b16 %v478
      %v605 = vunpack.c.l.b16 %v479
      %v606 = vunpack.c.h.b16 %v479
      %v607 = vunpack.c.l.b16 %v480
      %v608 = vunpack.c.h.b16 %v480
      %v609 = vunpack.c.l.b16 %v481
      %v610 = vunpack.c.h.b16 %v481
      %v611 = vunpack.c.l.b16 %v482
      %v612 = vunpack.c.h.b16 %v482
      %v613 = vunpack.c.l.b16 %v483
      %v614 = vunpack.c.h.b16 %v483
      %v615 = vunpack.c.l.b16 %v484
      %v616 = vunpack.c.h.b16 %v484
      %v617 = vunpack.c.l.b16 %v485
      %v618 = vunpack.c.h.b16 %v485
      %v619 = vunpack.c.l.b16 %v486
      %v620 = vunpack.c.h.b16 %v486
      %v621 = vunpack.c.l.b16 %v487
      %v622 = vunpack.c.h.b16 %v487
      %v623 = vunpack.c.l.b16 %v488
      %v624 = vunpack.c.h.b16 %v488
      %v625 = vunpack.c.l.b16 %v489
      %v626 = vunpack.c.h.b16 %v489
      %v627 = vunpack.c.l.b16 %v490
      %v628 = vunpack.c.h.b16 %v490
      %v629 = vunpack.c.l.b16 %v491
      %v630 = vunpack.c.h.b16 %v491
      %v631 = vunpack.c.l.b16 %v492
      %v632 = vunpack.c.h.b16 %v492
      %v633 = vunpack.c.l.b16 %v493
      %v634 = vunpack.c.h.b16 %v493
      %v635 = vunpack.c.l.b16 %v494
      %v636 = vunpack.c.h.b16 %v494
      %v637 = vunpack.c.l.b16 %v495
      %v638 = vunpack.c.h.b16 %v495
      %v639 = vunpack.c.l.b16 %v496
      %v640 = vunpack.c.h.b16 %v496
      %v641 = vpack.c.b16 %v547, %v545
      %v642 = vpack.c.b16 %v548, %v546
      %v643 = vpack.c.b16 %v551, %v549
      %v644 = vpack.c.b16 %v552, %v550
      %v645 = vpack.c.b16 %v555, %v553
      %v646 = vpack.c.b16 %v556, %v554
      %v647 = vpack.c.b16 %v559, %v557
      %v648 = vpack.c.b16 %v560, %v558
      %v649 = vpack.c.b16 %v563, %v561
      %v650 = vpack.c.b16 %v564, %v562
      %v651 = vpack.c.b16 %v567, %v565
      %v652 = vpack.c.b16 %v568, %v566
      %v653 = vpack.c.b16 %v571, %v569
      %v654 = vpack.c.b16 %v572, %v570
      %v655 = vpack.c.b16 %v575, %v573
      %v656 = vpack.c.b16 %v576, %v574
      %v657 = vpack.c.b16 %v579, %v577
      %v658 = vpack.c.b16 %v580, %v578
      %v659 = vpack.c.b16 %v583, %v581
      %v660 = vpack.c.b16 %v584, %v582
      %v661 = vpack.c.b16 %v587, %v585
      %v662 = vpack.c.b16 %v588, %v586
      %v663 = vpack.c.b16 %v591, %v589
      %v664 = vpack.c.b16 %v592, %v590
      %v665 = vpack.c.b16 %v595, %v593
      %v666 = vpack.c.b16 %v596, %v594
      %v667 = vpack.c.b16 %v599, %v597
      %v668 = vpack.c.b16 %v600, %v598
      %v669 = vpack.c.b16 %v603, %v601
      %v670 = vpack.c.b16 %v604, %v602
      %v671 = vpack.c.b16 %v607, %v605
      %v672 = vpack.c.b16 %v608, %v606
      %v673 = vpack.c.b16 %v611, %v609
      %v674 = vpack.c.b16 %v612, %v610
      %v675 = vpack.c.b16 %v615, %v613
      %v676 = vpack.c.b16 %v616, %v614
      %v677 = vpack.c.b16 %v619, %v617
      %v678 = vpack.c.b16 %v620, %v618
      %v679 = vpack.c.b16 %v623, %v621
      %v680 = vpack.c.b16 %v624, %v622
      %v681 = vpack.c.b16 %v627, %v625
      %v682 = vpack.c.b16 %v628, %v626
      %v683 = vpack.c.b16 %v631, %v629
      %v684 = vpack.c.b16 %v632, %v630
      %v685 = vpack.c.b16 %v635, %v633
      %v686 = vpack.c.b16 %v636, %v634
      %v687 = vpack.c.b16 %v639, %v637
      %v688 = vpack.c.b16 %v640, %v638
      %737 = vmatprep.subr.bf16.mxu0 %v656
      %738 = vmatpush1.bf16.msra.mxu0 %v655
      %739 = vmatprep.subr.bf16.mxu0 %v654
      %740 = vmatpush1.bf16.msra.mxu0 %v653
      %741 = vmatprep.subr.bf16.mxu0 %v652
      %742 = vmatpush1.bf16.msra.mxu0 %v651
      %743 = vmatprep.subr.bf16.mxu0 %v650
      %744 = vmatpush1.bf16.msra.mxu0 %v649
      %745 = vmatprep.subr.bf16.mxu0 %v648
      %746 = vmatpush1.bf16.msra.mxu0 %v647
      %747 = vmatprep.subr.bf16.mxu0 %v646
      %748 = vmatpush1.bf16.msra.mxu0 %v645
      %749 = vmatprep.subr.bf16.mxu0 %v644
      %750 = vmatpush1.bf16.msra.mxu0 %v643
      %751 = vmatprep.subr.bf16.mxu0 %v642
      %752 = vmatpush1.bf16.msra.mxu0 %v641
      %753 = vmatprep.subr.bf16.mxu0 %v672
      %754 = vmatpush2.bf16.msra.mxu0 %v671
      %755 = vmatprep.subr.bf16.mxu0 %v670
      %756 = vmatpush2.bf16.msra.mxu0 %v669
      %757 = vmatprep.subr.bf16.mxu0 %v668
      %758 = vmatpush2.bf16.msra.mxu0 %v667
      %759 = vmatprep.subr.bf16.mxu0 %v666
      %760 = vmatpush2.bf16.msra.mxu0 %v665
      %761 = vmatprep.subr.bf16.mxu0 %v664
      %762 = vmatpush2.bf16.msra.mxu0 %v663
      %763 = vmatprep.subr.bf16.mxu0 %v662
      %764 = vmatpush2.bf16.msra.mxu0 %v661
      %765 = vmatprep.subr.bf16.mxu0 %v660
      %766 = vmatpush2.bf16.msra.mxu0 %v659
      %767 = vmatprep.subr.bf16.mxu0 %v658
      %768 = vmatpush2.bf16.msra.mxu0 %v657
      %769 = vmatprep.mubr.bf16.mxu0 %v422
      %770 = vmatmul.mubr.bf16.gmra.mxu0 %v407
      %v771 = vpop.f32.mrf.mxu0
      %v772 = vadd.f32 0.0, %v771
      %v773 = vpop.f32.mrf.mxu0
      %v774 = vadd.f32 0.0, %v773
      %v775 = vpop.f32.mrf.mxu0
      %v776 = vadd.f32 0.0, %v775
      %v777 = vpop.f32.mrf.mxu0
      %v778 = vadd.f32 0.0, %v777
      %779 = vmatprep.mubr.bf16.mxu0 %v430
      %780 = vmatmul.mubr.bf16.gmra.mxu0 %v408
      %v781 = vpop.f32.mrf.mxu0
      %v782 = vadd.f32 0.0, %v781
      %v783 = vpop.f32.mrf.mxu0
      %v784 = vadd.f32 0.0, %v783
      %v785 = vpop.f32.mrf.mxu0
      %v786 = vadd.f32 0.0, %v785
      %v787 = vpop.f32.mrf.mxu0
      %v788 = vadd.f32 0.0, %v787
      %789 = vmatprep.mubr.bf16.mxu0 %v433
      %790 = vmatmul.mubr.bf16.gmra.mxu0 %v409
      %v791 = vpop.f32.mrf.mxu0
      %v792 = vadd.f32 0.0, %v791
      %v793 = vpop.f32.mrf.mxu0
      %v794 = vadd.f32 0.0, %v793
      %v795 = vpop.f32.mrf.mxu0
      %v796 = vpop.f32.mrf.mxu0
      %797 = vdwg.mxu0
      %798 = vmatprep.subr.bf16.mxu0 %v688
      %799 = vmatpush1.bf16.msra.mxu0 %v687
      %800 = vmatprep.subr.bf16.mxu0 %v686
      %801 = vmatpush1.bf16.msra.mxu0 %v685
      %802 = vmatprep.subr.bf16.mxu0 %v684
      %803 = vmatpush1.bf16.msra.mxu0 %v683
      %804 = vmatprep.subr.bf16.mxu0 %v682
      %805 = vmatpush1.bf16.msra.mxu0 %v681
      %806 = vmatprep.subr.bf16.mxu0 %v680
      %807 = vmatpush1.bf16.msra.mxu0 %v679
      %808 = vmatprep.subr.bf16.mxu0 %v678
      %809 = vmatpush1.bf16.msra.mxu0 %v677
      %810 = vmatprep.subr.bf16.mxu0 %v676
      %811 = vmatpush1.bf16.msra.mxu0 %v675
      %812 = vmatprep.subr.bf16.mxu0 %v674
      %813 = vmatpush1.bf16.msra.mxu0 %v673
      %814 = vmatprep.subr.bf16.mxu0 0
      %815 = vmatpush2.bf16.msra.mxu0 0
      %816 = vmatprep.subr.bf16.mxu0 0
      %817 = vmatpush2.bf16.msra.mxu0 0
      %818 = vmatprep.subr.bf16.mxu0 0
      %819 = vmatpush2.bf16.msra.mxu0 0
      %820 = vmatprep.subr.bf16.mxu0 0
      %821 = vmatpush2.bf16.msra.mxu0 0
      %822 = vmatprep.subr.bf16.mxu0 0
      %823 = vmatpush2.bf16.msra.mxu0 0
      %824 = vmatprep.subr.bf16.mxu0 0
      %825 = vmatpush2.bf16.msra.mxu0 0
      %826 = vmatprep.subr.bf16.mxu0 0
      %827 = vmatpush2.bf16.msra.mxu0 0
      %828 = vmatprep.subr.bf16.mxu0 0
      %829 = vmatpush2.bf16.msra.mxu0 0
      %830 = vmatprep.mubr.bf16.mxu0 0
      %831 = vmatmul.mubr.bf16.gmra.mxu0 %v443
      %v832 = vpop.f32.mrf.mxu0
      %v833 = vadd.f32 %v772, %v832
      %v834 = vpop.f32.mrf.mxu0
      %v835 = vadd.f32 %v774, %v834
      %v836 = vpop.f32.mrf.mxu0
      %v837 = vadd.f32 %v776, %v836
      %v838 = vpop.f32.mrf.mxu0
      %v839 = vadd.f32 %v778, %v838
      %840 = vmatprep.mubr.bf16.mxu0 0
      %841 = vmatmul.mubr.bf16.gmra.mxu0 %v445
      %v842 = vpop.f32.mrf.mxu0
      %v843 = vadd.f32 %v782, %v842
      %v844 = vpop.f32.mrf.mxu0
      %v845 = vadd.f32 %v784, %v844
      %v846 = vpop.f32.mrf.mxu0
      %v847 = vadd.f32 %v786, %v846
      %v848 = vpop.f32.mrf.mxu0
      %v849 = vadd.f32 %v788, %v848
      %850 = vmatprep.mubr.bf16.mxu0 0
      %851 = vmatmul.mubr.bf16.gmra.mxu0 %v444
      %v852 = vpop.f32.mrf.mxu0
      %v853 = vadd.f32 %v792, %v852
      %v854 = vpop.f32.mrf.mxu0
      %v855 = vadd.f32 %v794, %v854
      %v856 = vpop.f32.mrf.mxu0
      %v857 = vpop.f32.mrf.mxu0
      %858 = vdwg.mxu0
      %v859 = vxor.u32 %v835, 2147483648
      %v860 = vxor.u32 %v839, 2147483648
      %v861 = vxor.u32 %v845, 2147483648
      %v862 = vxor.u32 %v849, 2147483648
      %v863 = vxor.u32 %v855, 2147483648
      %v864 = vmul.f32 %v859, 1.442695
      %v865 = vpow.pop %v864
      %v866 = vmul.f32 %v860, 1.442695
      %v867 = vpow.pop %v866
      %v868 = vmul.f32 %v861, 1.442695
      %v869 = vpow.pop %v868
      %v870 = vmul.f32 %v862, 1.442695
      %v871 = vpow.pop %v870
      %v872 = vmul.f32 %v863, 1.442695
      %v873 = vpow.pop %v872
      %v874 = vadd.f32 %v865, 1.0
      %v875 = vadd.f32 %v867, 1.0
      %v876 = vadd.f32 %v869, 1.0
      %v877 = vadd.f32 %v871, 1.0
      %v878 = vadd.f32 %v873, 1.0
      %v879 = vrcp.pop %v874
      %v880 = vmul.f32 1.0, %v879
      %v881 = vrcp.pop %v875
      %v882 = vmul.f32 1.0, %v881
      %v883 = vrcp.pop %v876
      %v884 = vmul.f32 1.0, %v883
      %v885 = vrcp.pop %v877
      %v886 = vmul.f32 1.0, %v885
      %v887 = vrcp.pop %v878
      %v888 = vmul.f32 1.0, %v887
      %v889 = vmul.f32 %v833, %v880
      %v890 = vmul.f32 %v837, %v882
      %v891 = vmul.f32 %v843, %v884
      %v892 = vmul.f32 %v847, %v886
      %v893 = vmul.f32 %v853, %v888
      %vm894 = vcmask 1046528
      %v895 = vrot.slane %v380, 1
      %v896 = vrot.slane %v385, 1
      %v897 = vsel %vm894, %v895, %v896
      %v898 = vrot.slane %v390, 1
      %v899 = vsel %vm894, %v896, %v898
      %v900 = vrot.slane %v395, 1
      %v901 = vsel %vm894, %v898, %v900
      %v902 = vrot.slane %v400, 1
      %v903 = vsel %vm894, %v900, %v902
      %v909 = vmul.f32 %v889, %v897
      %v910 = vmul.f32 %v890, %v899
      %v911 = vmul.f32 %v891, %v901
      %v912 = vmul.f32 %v892, %v903
      %v913 = vmul.f32 %v893, %v902
      %v914 = vld [vmem:[%s4] sm:$0x1]
      %v916 = vlaneseq
      %v917 = vshrl.u32 %v916, 7
      %v918 = vsub.s32 0, %v917
      %v919 = vrot.slane %v914, %v918
      %v921 = vmul.f32 %v909, %v919
      %v922 = vmul.f32 %v910, %v919
      %v923 = vmul.f32 %v911, %v919
      %v924 = vmul.f32 %v912, %v919
      %s925 = scalar_lea.vmem %s4, 1
      %v926 = vld [vmem:[%s925] sm:$0x1]
      %v928 = vlaneseq
      %v929 = vshrl.u32 %v928, 7
      %v930 = vsub.s32 0, %v929
      %v931 = vrot.slane %v926, %v930
      %v933 = vmul.f32 %v909, %v931
      %v934 = vmul.f32 %v910, %v931
      %v935 = vmul.f32 %v911, %v931
      %v936 = vmul.f32 %v912, %v931
      %v937 = vmul.f32 %v913, %v931
      %v943 = vrot.slane %v933, 1
      %v944 = vrot.slane %v934, 1
      %v945 = vsel %vm894, %v943, %v944
      %v946 = vrot.slane %v935, 1
      %v947 = vsel %vm894, %v944, %v946
      %v948 = vrot.slane %v936, 1
      %v949 = vsel %vm894, %v946, %v948
      %v950 = vrot.slane %v937, 1
      %v951 = vsel %vm894, %v948, %v950
      %v956 = vadd.f32 %v921, %v945
      %v957 = vadd.f32 %v922, %v947
      %v958 = vadd.f32 %v923, %v949
      %v959 = vadd.f32 %v924, %v951
      %s960 = scalar_lea.vmem %s4, 2
      %v961 = vld [vmem:[%s960] sm:$0x1]
      %v963 = vlaneseq
      %v964 = vshrl.u32 %v963, 7
      %v965 = vsub.s32 0, %v964
      %v966 = vrot.slane %v961, %v965
      %v968 = vmul.f32 %v909, %v966
      %v969 = vmul.f32 %v910, %v966
      %v970 = vmul.f32 %v911, %v966
      %v971 = vmul.f32 %v912, %v966
      %v972 = vmul.f32 %v913, %v966
      %vm978 = vcmask 1045504
      %v979 = vrot.slane %v968, 2
      %v980 = vrot.slane %v969, 2
      %v981 = vsel %vm978, %v979, %v980
      %v982 = vrot.slane %v970, 2
      %v983 = vsel %vm978, %v980, %v982
      %v984 = vrot.slane %v971, 2
      %v985 = vsel %vm978, %v982, %v984
      %v986 = vrot.slane %v972, 2
      %v987 = vsel %vm978, %v984, %v986
      %v992 = vadd.f32 %v956, %v981
      %v993 = vadd.f32 %v957, %v983
      %v994 = vadd.f32 %v958, %v985
      %v995 = vadd.f32 %v959, %v987
      %v996 = vrot.slane %v380, 2
      %v997 = vrot.slane %v385, 2
      %v998 = vsel %vm978, %v996, %v997
      %v999 = vrot.slane %v390, 2
      %v1000 = vsel %vm978, %v997, %v999
      %v1001 = vrot.slane %v395, 2
      %v1002 = vsel %vm978, %v999, %v1001
      %v1003 = vrot.slane %v400, 2
      %v1004 = vsel %vm978, %v1001, %v1003
      %v1009 = vmul.f32 %v992, %v998
      %v1010 = vmul.f32 %v993, %v1000
      %v1011 = vmul.f32 %v994, %v1002
      %v1012 = vmul.f32 %v995, %v1004
      %v1013 = vpack.c.bf16 %v1010, %v1009
      %v1014 = vpack.c.bf16 %v1012, %v1011
      %v1017 = vunpack.c.l.b16 %v1013
      %v1018 = vunpack.c.h.b16 %v1013
      %v1019 = vunpack.c.l.b16 %v1014
      %v1020 = vunpack.c.h.b16 %v1014
      %v1021 = vpack.c.b16 %v1017, %v1017
      %v1022 = vpack.c.b16 %v1018, %v1018
      %v1023 = vpack.c.b16 %v1019, %v1019
      %v1024 = vpack.c.b16 %v1020, %v1020
      %1029 = vst [vmem:[%s337] sm:$0xf] %v1021
      %1030 = vst [vmem:[%s337 + $0x4] sm:$0xf] %v1022
      %1031 = vst [vmem:[%s337 + $0x8] sm:$0xf] %v1023
      %1032 = vst [vmem:[%s337 + $0xc] sm:$0xf] %v1024
      %v1033 = vadd.f32 %v1009, %v1010
      %v1034 = vadd.f32 %v1033, %v1011
      %v1035 = vadd.f32 %v1034, %v1012
      %v1036 = vrot.slane %v1035, 4
      %v1037 = vadd.f32 %v1035, %v1036
      %v1038 = vrot.slane %v1037, 2
      %v1039 = vadd.f32 %v1037, %v1038
      %v1040 = vrot.slane %v1039, 1
      %v1041 = vadd.f32 %v1039, %v1040
      %v1042 = vmul.f32 %v1009, %v1009
      %v1043 = vmul.f32 %v1010, %v1010
      %v1044 = vmul.f32 %v1011, %v1011
      %v1045 = vmul.f32 %v1012, %v1012
      %v1046 = vadd.f32 %v1042, %v1043
      %v1047 = vadd.f32 %v1046, %v1044
      %v1048 = vadd.f32 %v1047, %v1045
      %v1049 = vrot.slane %v1048, 4
      %v1050 = vadd.f32 %v1048, %v1049
      %v1051 = vrot.slane %v1050, 2
      %v1052 = vadd.f32 %v1050, %v1051
      %v1053 = vrot.slane %v1052, 1
      %v1054 = vadd.f32 %v1052, %v1053
      %vm1055 = vcmask 1040384
      %v1056 = vsel %vm1055, %v1041, %v1054
      %1057 = vst [vmem:[%s346] sm:$0x3] %v1056
      %s1058 = smul.u32 4, %s23
      %p1059 = scmp.lt.s32.totalorder %s22, 1
      %s1060 = scalar_select %p1059, %s22, 1
      %p1061 = scmp.lt.s32.totalorder %s1058, 7
      %s1062 = scalar_select %p1061, %s1058, 7
      %s1063 = smul.addr %s1060, 8
      %s1064 = sadd.s32 %s1062, %s1063
      %s1065 = smul.addr %s1064, 4
      %s1066 = scalar_lea.vmem %s5, %s1065
      %p1067 = scmp.lt.s32.totalorder %s22, 1
      %s1068 = scalar_select %p1067, %s22, 1
      %p1069 = scmp.lt.s32.totalorder %s23, 1
      %s1070 = scalar_select %p1069, %s23, 1
      %s1071 = smul.addr %s1068, 2
      %s1072 = sadd.s32 %s1070, %s1071
      %s1073 = smul.addr %s1072, 2
      %s1074 = scalar_lea.vmem %s6, %s1073
      // Predicated region
      $region41: #{_lambda_.2} parent=39 // pred_check
        %p1075 = pneg %p172
      $region42: #{_lambda_.2} parent=39 // pred_check_branch
        %1077 = sbr.rel (%p1075) target = $region44
      $region43: #{_lambda_.2} parent=39 // pred_region
        %s1078 = smul.u32 4, %s23
      $region44: #{_lambda_.2} parent=39 // pred_fallthru
        _
      // Predicated region
      $region45: #{_lambda_.2} parent=39 // pred_check
        %p1079 = pneg %p200
      $region46: #{_lambda_.2} parent=39 // pred_check_branch
        %1081 = sbr.rel (%p1079) target = $region48
      $region47: #{_lambda_.2} parent=39 // pred_region
        _
      $region48: #{_lambda_.2} parent=39 // pred_fallthru
        _
    $region40: #{_lambda_.2} parent=5 // pred_fallthru
      _
    %p1082 = scmp.le.s32.totalorder 2, %s13
    // Predicated region
    $region49: #{_lambda_.2} parent=5 // pred_check
      %p1083 = pneg %p1082
    $region50: #{_lambda_.2} parent=5 // pred_check_branch
      %1085 = sbr.rel (%p1083) target = $region52
    $region51: #{_lambda_.2} parent=5 // pred_region
      %s1086 = ssub.s32 %s13, 2
      // Predicated region
      $region53: #{_lambda_.2} parent=51 // pred_check
        %p1087 = pneg %p178
      $region54: #{_lambda_.2} parent=51 // pred_check_branch
        %1089 = sbr.rel (%p1087) target = $region56
      $region55: #{_lambda_.2} parent=51 // pred_region
        %s1090 = smul.u32 4, %s25
        %p1091 = scmp.lt.s32.totalorder %s24, 1
        %s1092 = scalar_select %p1091, %s24, 1
        %p1093 = scmp.lt.s32.totalorder %s1090, 7
        %s1094 = scalar_select %p1093, %s1090, 7
        %s1095 = smul.addr %s1092, 8
        %s1096 = sadd.s32 %s1094, %s1095
        %s1097 = smul.addr %s1096, 4
        %s1098 = scalar_lea.vmem %s5, %s1097
      $region56: #{_lambda_.2} parent=51 // pred_fallthru
        _
      // Predicated region
      $region57: #{_lambda_.2} parent=51 // pred_check
        %p1099 = pneg %p206
      $region58: #{_lambda_.2} parent=51 // pred_check_branch
        %1101 = sbr.rel (%p1099) target = $region60
      $region59: #{_lambda_.2} parent=51 // pred_region
        %p1102 = scmp.lt.s32.totalorder %s24, 1
        %s1103 = scalar_select %p1102, %s24, 1
        %p1104 = scmp.lt.s32.totalorder %s25, 1
        %s1105 = scalar_select %p1104, %s25, 1
        %s1106 = smul.addr %s1103, 2
        %s1107 = sadd.s32 %s1105, %s1106
        %s1108 = smul.addr %s1107, 2
        %s1109 = scalar_lea.vmem %s6, %s1108
      $region60: #{_lambda_.2} parent=51 // pred_fallthru
        _
    $region52: #{_lambda_.2} parent=5 // pred_fallthru
      _
  $region6: #{_lambda_.2} parent=0 // loop_footer
    %s17 = sadd.s32 1, %s13
  $region7: #{_lambda_.2} parent=0 // loop_footer_branch
    %12 = sbr.rel target = $region3
  $region8: #{_lambda_.2} parent=0 // loop_exit
    _

</llo_original>
